<compile_context>
chip_gen: v5e
topology: v5e:2x2
jax: 0.10.0
libtpu: 0.0.40
codegen_flags: <defaults>
</compile_context>

<pallas_src>
import functools

import jax
import jax.numpy as jnp
import numpy as np
from jax.experimental import pallas as pl
from jax.experimental.pallas import tpu as pltpu


def attention_kernel(x_ref, wqkv_ref, wproj_ref, bproj_ref, *rest,
                     num_heads, head_dim, tq, scale, store_attention, concat_merge):
    """One (batch, query-tile) grid step of multi-head self-attention.

    x_ref:     (1, N, C)      tokens of this batch element (block constant across q-tiles)
    wqkv_ref:  (C, 3C)        qkv projection weight (in, out)
    wproj_ref: (C, C)         output projection weight (in, out)
    bproj_ref: (1, C)         output projection bias
    o_ref:     (1, TQ, C)     output query tile
    attn_ref:  (1, H, TQ, N)  softmax attention maps (only when store_attention)
    q_s/k_s/v_s: (H, N, hd)   head-major scratch, filled once per batch element (qi == 0)
    ctx_s:     (TQ, C)        merged-head context scratch (only when not concat_merge)
    """
    idx = 0
    o_ref = rest[idx]; idx += 1
    attn_ref = None
    if store_attention:
        attn_ref = rest[idx]; idx += 1
    q_s, k_s, v_s = rest[idx], rest[idx + 1], rest[idx + 2]; idx += 3
    ctx_s = None if concat_merge else rest[idx]

    qi = pl.program_id(1)
    C = num_heads * head_dim

    # --- QKV projection: once per batch element (q-tile axis is sequential), cached in
    # VMEM scratch and reused by every query tile of the same batch element. ----------
    @pl.when(qi == 0)
    def _():
        x2d = x_ref[0]                                             # (N, C), native dtype
        qkv = jnp.dot(x2d, wqkv_ref[...],
                      preferred_element_type=jnp.float32)          # (N, 3C), f32 acc
        # Fold the softmax scale into Q here: N*C multiplies once per batch element
        # instead of H*TQ*N multiplies on the scores tensor on every tile.
        q_f32 = qkv[:, 0:C] * scale
        # Head-major split; runs once per batch element, amortized over all q-tiles.
        # TODO(synk): with head_dim < 128 the (H, N, hd) scratch lane-pads to 128; a
        # head-grouped layout (group width a multiple of 128 lanes) would remove the
        # padding/masked stores at the cost of a lane-splitting relayout in the einsum.
        for h in range(num_heads):
            lo = h * head_dim
            q_s[h] = q_f32[:, lo:lo + head_dim].astype(q_s.dtype)
            k_s[h] = qkv[:, C + lo:C + lo + head_dim].astype(k_s.dtype)
            v_s[h] = qkv[:, 2 * C + lo:2 * C + lo + head_dim].astype(v_s.dtype)

    row0 = pl.multiple_of(qi * tq, tq)
    q = q_s[:, pl.ds(row0, tq), :]                                 # (H, TQ, hd), pre-scaled
    k = k_s[...]                                                   # (H, N, hd)
    v = v_s[...]                                                   # (H, N, hd)

    # --- Scores for all heads in one batched matmul (contraction on the last dim). ---
    s = jnp.einsum("hqd,hkd->hqk", q, k,
                   preferred_element_type=jnp.float32)             # (H, TQ, N) f32
    s = s - jnp.max(s, axis=-1, keepdims=True)
    e = jnp.exp(s)
    # Exact reciprocal: only H*TQ denominators, approx buys nothing and costs accuracy.
    r = pl.reciprocal(jnp.sum(e, axis=-1, keepdims=True), approx=False)   # (H, TQ, 1)

    if store_attention:
        p = e * r                                                  # normalized maps needed
        attn_ref[0] = p.astype(attn_ref.dtype)
        ctx = jnp.einsum("hqk,hkd->hqd", p.astype(v.dtype), v,
                         preferred_element_type=jnp.float32)       # (H, TQ, hd) f32
    else:
        # Fast path: contract un-normalized exp(s) with V, then normalize the small
        # (H, TQ, hd) context -- saves a full (H, TQ, N) f32 multiply per tile.
        ctx = jnp.einsum("hqk,hkd->hqd", e.astype(v.dtype), v,
                         preferred_element_type=jnp.float32)
        ctx = ctx * r

    # --- Merge heads (H, TQ, hd) -> (TQ, C). ------------------------------------------
    if concat_merge:
        # One lane-dim concatenate instead of H separate sub-128-lane column writes.
        ctx2d = jnp.concatenate([ctx[h] for h in range(num_heads)],
                                axis=-1).astype(x_ref.dtype)       # (TQ, C)
    else:
        for h in range(num_heads):
            ctx_s[:, h * head_dim:(h + 1) * head_dim] = ctx[h].astype(ctx_s.dtype)
        ctx2d = ctx_s[...]

    # --- Output projection (MXU-efficient: M=TQ, K=C, N=C). ---------------------------
    y = jnp.dot(ctx2d, wproj_ref[...], preferred_element_type=jnp.float32)
    y = y + bproj_ref[...].astype(jnp.float32)
    o_ref[0] = y.astype(o_ref.dtype)
    # TODO(synk): attn_drop / proj_drop are identity (p=0.0); no dropout implemented.
    # TODO(synk): qkv_bias=False (module default); add a qkv bias operand if needed.


def _ceil_to(v, m):
    return -(-v // m) * m


def _vmem_estimate_bytes(N, C, H, hd, tq, in_b, out_b, attn_b, store_attention, wbufs):
    """Rough per-core VMEM residency (lane/sublane padding included)."""
    lane, sub = 128, 8
    hd_p, c_p, c3_p = _ceil_to(hd, lane), _ceil_to(C, lane), _ceil_to(3 * C, lane)
    n_l, n_s, tq_s = _ceil_to(N, lane), _ceil_to(N, sub), _ceil_to(tq, sub)
    est = 2 * n_s * c_p * in_b                                    # x block (double-buffered)
    est += wbufs * (c_p * c3_p + c_p * c_p + sub * c_p) * in_b    # weights + bias
    est += 2 * tq_s * c_p * out_b                                 # output block
    if store_attention:
        est += 2 * H * tq_s * n_l * attn_b                        # attention-map block
    est += 3 * H * n_s * hd_p * in_b                              # q/k/v scratch (lane-padded)
    est += n_s * c3_p * 4                                         # f32 qkv temp (qi == 0)
    est += 3 * H * tq_s * n_l * 4                                 # live f32 s / e / p temps
    est += 2 * H * tq_s * hd_p * 4                                # f32 ctx + merged context
    return est


def attention_forward(x, w_qkv, w_proj, b_proj, *, num_heads, tq=None,
                      store_attention=True, attn_dtype=None, compute_dtype=None):
    """ViT multi-head self-attention forward (qkv_bias=False, dropout p=0.0).

    Returns out (B, N, C) and, when store_attention, the softmax maps (B, H, N, N).
    compute_dtype (e.g. jnp.bfloat16) casts activations/weights for the MXU while
    keeping f32 accumulation; attn_dtype controls the stored attention-map dtype
    (default: same dtype as the compute inputs).
    """
    orig_dtype = x.dtype
    if compute_dtype is not None and jnp.dtype(compute_dtype) != jnp.dtype(x.dtype):
        cd = jnp.dtype(compute_dtype)
        x, w_qkv, w_proj, b_proj = (a.astype(cd) for a in (x, w_qkv, w_proj, b_proj))

    B, N, C = x.shape
    assert C % num_heads == 0
    head_dim = C // num_heads
    scale = head_dim ** (-0.5)
    out_dtype = orig_dtype
    attn_dt = jnp.dtype(attn_dtype) if attn_dtype is not None else jnp.dtype(x.dtype)

    in_b = jnp.dtype(x.dtype).itemsize
    out_b = jnp.dtype(out_dtype).itemsize
    attn_b = attn_dt.itemsize

    # Per-generation VMEM budget: ~7/8 of physical VMEM (v5e/v6e 128 MiB -> ~112 MiB,
    # v7x 64 MiB -> ~56 MiB), leaving headroom for compiler-internal scratch.
    try:
        vmem_cap = int(getattr(pltpu.get_tpu_info(), "vmem_capacity_bytes",
                               128 * 1024 * 1024))
    except Exception:                                             # pragma: no cover
        vmem_cap = 128 * 1024 * 1024
    vmem_limit = int(min(max((7 * vmem_cap) // 8, 32 * 1024 * 1024), vmem_cap))

    # Query-tile size: keep the projection matmuls at M >= 128/256 whenever the live
    # softmax temporaries / attn-map block fit; shrink TQ only when the (padding-aware)
    # VMEM estimate would blow the budget (this is what drops TQ to 128 on v7x).
    if tq is None:
        budget = int(0.8 * vmem_limit)
        for cand in (256, 128, 64, 32, 16, 8):
            if N % cand == 0 and _vmem_estimate_bytes(
                    N, C, num_heads, head_dim, cand, in_b, out_b, attn_b,
                    store_attention, 1) <= budget:
                tq = cand
                break
        else:
            tq = next((t for t in (8, 16, 32, 64, 128, 256) if N % t == 0), N)
    assert N % tq == 0
    nq = N // tq

    flops = 2 * B * (N * C * 3 * C                      # qkv projection
                     + 2 * num_heads * N * N * head_dim  # scores + p@v
                     + N * C * C)                        # output projection
    transcendentals = B * num_heads * N * N
    bytes_accessed = (in_b * (x.size + w_qkv.size + w_proj.size + b_proj.size)
                      + out_b * B * N * C
                      + (attn_b * B * num_heads * N * N if store_attention else 0))
    cost = pl.CostEstimate(flops=int(flops), transcendentals=int(transcendentals),
                           bytes_accessed=int(bytes_accessed))

    if store_attention:
        out_shape = (jax.ShapeDtypeStruct((B, N, C), out_dtype),
                     jax.ShapeDtypeStruct((B, num_heads, N, N), attn_dt))
        out_specs = (pl.BlockSpec((1, tq, C), lambda b, q: (b, q, 0)),
                     pl.BlockSpec((1, num_heads, tq, N), lambda b, q: (b, 0, q, 0)))
    else:
        out_shape = jax.ShapeDtypeStruct((B, N, C), out_dtype)
        out_specs = pl.BlockSpec((1, tq, C), lambda b, q: (b, q, 0))

    def build(optimized_layout):
        kernel = functools.partial(
            attention_kernel, num_heads=num_heads, head_dim=head_dim, tq=tq,
            scale=scale, store_attention=store_attention,
            concat_merge=optimized_layout)

        # Replicated operands: their block index never changes, so single-buffer them
        # (default double buffering keeps a useless second copy of the weights in VMEM).
        wkw = (dict(pipeline_mode=pl.Buffered(buffer_count=1))
               if optimized_layout else {})
        in_specs = [
            pl.BlockSpec((1, N, C), lambda b, q: (b, 0, 0)),        # x (per batch element)
            pl.BlockSpec((C, 3 * C), lambda b, q: (0, 0), **wkw),   # w_qkv (replicated)
            pl.BlockSpec((C, C), lambda b, q: (0, 0), **wkw),       # w_proj (replicated)
            pl.BlockSpec((1, C), lambda b, q: (0, 0), **wkw),       # b_proj (replicated)
        ]
        scratch_shapes = [
            pltpu.VMEM((num_heads, N, head_dim), x.dtype),   # q (head-major, pre-scaled)
            pltpu.VMEM((num_heads, N, head_dim), x.dtype),   # k
            pltpu.VMEM((num_heads, N, head_dim), x.dtype),   # v
        ]
        if not optimized_layout:
            scratch_shapes.append(pltpu.VMEM((tq, C), x.dtype))   # merged-head context

        return pl.pallas_call(
            kernel,
            out_shape=out_shape,
            grid_spec=pltpu.PrefetchScalarGridSpec(
                num_scalar_prefetch=0,
                grid=(B, nq),
                in_specs=in_specs,
                out_specs=out_specs,
                scratch_shapes=scratch_shapes,
            ),
            # The q-tile axis MUST stay "arbitrary": Q/K/V are computed at qi == 0 and
            # cached in VMEM scratch for the remaining q-tiles of the same batch element,
            # so that axis has to be iterated sequentially on one core.
            # TODO(synk): to use both v7x TensorCores at B == 1, move the QKV projection
            # into a separate prologue call so this axis can become "parallel".
            compiler_params=pltpu.CompilerParams(
                dimension_semantics=("parallel", "arbitrary"),
                vmem_limit_bytes=vmem_limit,
            ),
            cost_estimate=cost,
        )

    args = (x, w_qkv, w_proj, b_proj)
    try:
        return build(True)(*args)
    except Exception:
        # Conservative fallback (double-buffered weights, scratch-based head merge) in
        # case pipeline_mode=Buffered(1) or the lane-dim concatenate is unsupported by
        # the installed Pallas/Mosaic version.
        return build(False)(*args)


def attention_reference(x, w_qkv, w_proj, b_proj, *, num_heads):
    """Pure-JAX reference mirroring the PyTorch forward (highest matmul precision)."""
    B, N, C = x.shape
    head_dim = C // num_heads
    scale = head_dim ** (-0.5)
    with jax.default_matmul_precision("highest"):
        qkv = x @ w_qkv                                              # (B, N, 3C)
        qkv = qkv.reshape(B, N, 3, num_heads, head_dim).transpose(2, 0, 3, 1, 4)
        q, k, v = qkv[0], qkv[1], qkv[2]                             # (B, H, N, hd)
        attn = jnp.einsum("bhnd,bhmd->bhnm", q, k) * scale
        attn = jax.nn.softmax(attn, axis=-1)
        ctx = jnp.einsum("bhnm,bhmd->bhnd", attn, v)
        ctx = ctx.transpose(0, 2, 1, 3).reshape(B, N, C)
        out = ctx @ w_proj + b_proj
    return out, attn


if __name__ == "__main__":
    # Small shapes consistent with the module: dim=32, num_heads=4 -> head_dim=8.
    # N=16 with tq=8 exercises the multi-query-tile path (grid = (B, 2)).
    B, N, C = 2, 16, 32
    num_heads = 4

    key = jax.random.PRNGKey(0)
    kx, kq, kp, kb = jax.random.split(key, 4)
    wscale = C ** (-0.5)
    x = jax.random.normal(kx, (B, N, C), dtype=jnp.float32)
    w_qkv = jax.random.normal(kq, (C, 3 * C), dtype=jnp.float32) * wscale   # qkv_bias=False
    w_proj = jax.random.normal(kp, (C, C), dtype=jnp.float32) * wscale
    b_proj = jax.random.normal(kb, (1, C), dtype=jnp.float32) * wscale

    ref_out, ref_attn = attention_reference(x, w_qkv, w_proj, b_proj, num_heads=num_heads)

    # Path 1: store_attention=True (attention maps returned, like the torch module).
    out, attn_maps = attention_forward(x, w_qkv, w_proj, b_proj,
                                       num_heads=num_heads, tq=8, store_attention=True)
    out = jax.block_until_ready(out)
    attn_maps = jax.block_until_ready(attn_maps)
    np.testing.assert_allclose(np.asarray(out), np.asarray(ref_out),
                               rtol=5e-4, atol=5e-4)
    np.testing.assert_allclose(np.asarray(attn_maps), np.asarray(ref_attn),
                               rtol=5e-4, atol=5e-4)

    # Path 2: store_attention=False fast path (deferred softmax normalization).
    out_fast = attention_forward(x, w_qkv, w_proj, b_proj,
                                 num_heads=num_heads, tq=8, store_attention=False)
    out_fast = jax.block_until_ready(out_fast)
    np.testing.assert_allclose(np.asarray(out_fast), np.asarray(ref_out),
                               rtol=5e-4, atol=5e-4)

    print("KERNEL_OK")
</pallas_src>

<mosaic_0001>
module attributes {stable_mosaic.version = 11 : i64} {
  func.func @attention_kernel(%arg0: i32, %arg1: i32, %arg2: memref<1x16x32xf32, #tpu.memory_space<vmem>>, %arg3: memref<32x96xf32, #tpu.memory_space<vmem>>, %arg4: memref<32x32xf32, #tpu.memory_space<vmem>>, %arg5: memref<1x32xf32, #tpu.memory_space<vmem>>, %arg6: memref<1x8x32xf32, #tpu.memory_space<vmem>>, %arg7: memref<1x4x8x16xf32, #tpu.memory_space<vmem>>, %arg8: memref<4x16x8xf32, #tpu.memory_space<vmem>>, %arg9: memref<4x16x8xf32, #tpu.memory_space<vmem>>, %arg10: memref<4x16x8xf32, #tpu.memory_space<vmem>>) attributes {dimension_semantics = [#tpu.dimension_semantics<parallel>, #tpu.dimension_semantics<arbitrary>], iteration_bounds = array<i64: 2, 2>, scalar_prefetch = 0 : i64, scratch_operands = 3 : i64, tpu.core_type = #tpu.core_type<tc>, window_params = [{transform_indices = @transform_0, window_bounds = array<i64: 1, 16, 32>}, {pipeline_mode = #tpu.pipeline_mode<synchronous>, transform_indices = @transform_1, window_bounds = array<i64: 32, 96>}, {pipeline_mode = #tpu.pipeline_mode<synchronous>, transform_indices = @transform_2, window_bounds = array<i64: 32, 32>}, {pipeline_mode = #tpu.pipeline_mode<synchronous>, transform_indices = @transform_3, window_bounds = array<i64: 1, 32>}, {transform_indices = @transform_4, window_bounds = array<i64: 1, 8, 32>}, {transform_indices = @transform_5, window_bounds = array<i64: 1, 4, 8, 16>}]} {
    %c0_i32 = arith.constant 0 : i32
    %0 = arith.cmpi eq, %arg1, %c0_i32 : i32
    %1 = arith.extui %0 : i1 to i32
    %c0_i32_0 = arith.constant 0 : i32
    %2 = arith.cmpi ne, %1, %c0_i32_0 : i32
    scf.if %2 {
      %c0_23 = arith.constant 0 : index
      %c0_24 = arith.constant 0 : index
      %c0_25 = arith.constant 0 : index
      %41 = vector.load %arg2[%c0_23, %c0_24, %c0_25] : memref<1x16x32xf32, #tpu.memory_space<vmem>>, vector<1x16x32xf32>
      %42 = vector.shape_cast %41 : vector<1x16x32xf32> to vector<16x32xf32>
      %c0_26 = arith.constant 0 : index
      %c0_27 = arith.constant 0 : index
      %43 = vector.load %arg3[%c0_26, %c0_27] : memref<32x96xf32, #tpu.memory_space<vmem>>, vector<32x96xf32>
      %cst_28 = arith.constant dense<0.000000e+00> : vector<16x96xf32>
      %44 = tpu.matmul %42, %43, %cst_28 {dimension_numbers = #tpu.dot_dimension_numbers<[1], [0], [0], [1], [0, 0, 1, 1], [], []>} : vector<16x32xf32>, vector<32x96xf32>, vector<16x96xf32> -> vector<16x96xf32>
      %45 = vector.extract_strided_slice %44 {offsets = [0, 0], sizes = [16, 32], strides = [1, 1]} : vector<16x96xf32> to vector<16x32xf32>
      %cst_29 = arith.constant 0.353553385 : f32
      %46 = vector.broadcast %cst_29 : f32 to vector<16x32xf32>
      %47 = arith.mulf %45, %46 : vector<16x32xf32>
      %48 = vector.extract_strided_slice %47 {offsets = [0, 0], sizes = [16, 8], strides = [1, 1]} : vector<16x32xf32> to vector<16x8xf32>
      %c0_30 = arith.constant 0 : index
      %c0_31 = arith.constant 0 : index
      %c0_32 = arith.constant 0 : index
      %49 = vector.load %arg8[%c0_30, %c0_31, %c0_32] : memref<4x16x8xf32, #tpu.memory_space<vmem>>, vector<1x16x8xf32>
      %50 = vector.shape_cast %49 : vector<1x16x8xf32> to vector<16x8xf32>
      %51 = vector.shape_cast %48 : vector<16x8xf32> to vector<1x16x8xf32>
      tpu.vector_store %arg8[%c0_30, %c0_31, %c0_32], %51 {strides = array<i32>} : memref<4x16x8xf32, #tpu.memory_space<vmem>>, vector<1x16x8xf32>,
      %52 = vector.extract_strided_slice %44 {offsets = [0, 32], sizes = [16, 8], strides = [1, 1]} : vector<16x96xf32> to vector<16x8xf32>
      %c0_33 = arith.constant 0 : index
      %c0_34 = arith.constant 0 : index
      %c0_35 = arith.constant 0 : index
      %53 = vector.load %arg9[%c0_33, %c0_34, %c0_35] : memref<4x16x8xf32, #tpu.memory_space<vmem>>, vector<1x16x8xf32>
      %54 = vector.shape_cast %53 : vector<1x16x8xf32> to vector<16x8xf32>
      %55 = vector.shape_cast %52 : vector<16x8xf32> to vector<1x16x8xf32>
      tpu.vector_store %arg9[%c0_33, %c0_34, %c0_35], %55 {strides = array<i32>} : memref<4x16x8xf32, #tpu.memory_space<vmem>>, vector<1x16x8xf32>,
      %56 = vector.extract_strided_slice %44 {offsets = [0, 64], sizes = [16, 8], strides = [1, 1]} : vector<16x96xf32> to vector<16x8xf32>
      %c0_36 = arith.constant 0 : index
      %c0_37 = arith.constant 0 : index
      %c0_38 = arith.constant 0 : index
      %57 = vector.load %arg10[%c0_36, %c0_37, %c0_38] : memref<4x16x8xf32, #tpu.memory_space<vmem>>, vector<1x16x8xf32>
      %58 = vector.shape_cast %57 : vector<1x16x8xf32> to vector<16x8xf32>
      %59 = vector.shape_cast %56 : vector<16x8xf32> to vector<1x16x8xf32>
      tpu.vector_store %arg10[%c0_36, %c0_37, %c0_38], %59 {strides = array<i32>} : memref<4x16x8xf32, #tpu.memory_space<vmem>>, vector<1x16x8xf32>,
      %60 = vector.extract_strided_slice %47 {offsets = [0, 8], sizes = [16, 8], strides = [1, 1]} : vector<16x32xf32> to vector<16x8xf32>
      %c1 = arith.constant 1 : index
      %c0_39 = arith.constant 0 : index
      %c0_40 = arith.constant 0 : index
      %61 = vector.load %arg8[%c1, %c0_39, %c0_40] : memref<4x16x8xf32, #tpu.memory_space<vmem>>, vector<1x16x8xf32>
      %62 = vector.shape_cast %61 : vector<1x16x8xf32> to vector<16x8xf32>
      %63 = vector.shape_cast %60 : vector<16x8xf32> to vector<1x16x8xf32>
      tpu.vector_store %arg8[%c1, %c0_39, %c0_40], %63 {strides = array<i32>} : memref<4x16x8xf32, #tpu.memory_space<vmem>>, vector<1x16x8xf32>,
      %64 = vector.extract_strided_slice %44 {offsets = [0, 40], sizes = [16, 8], strides = [1, 1]} : vector<16x96xf32> to vector<16x8xf32>
      %c1_41 = arith.constant 1 : index
      %c0_42 = arith.constant 0 : index
      %c0_43 = arith.constant 0 : index
      %65 = vector.load %arg9[%c1_41, %c0_42, %c0_43] : memref<4x16x8xf32, #tpu.memory_space<vmem>>, vector<1x16x8xf32>
      %66 = vector.shape_cast %65 : vector<1x16x8xf32> to vector<16x8xf32>
      %67 = vector.shape_cast %64 : vector<16x8xf32> to vector<1x16x8xf32>
      tpu.vector_store %arg9[%c1_41, %c0_42, %c0_43], %67 {strides = array<i32>} : memref<4x16x8xf32, #tpu.memory_space<vmem>>, vector<1x16x8xf32>,
      %68 = vector.extract_strided_slice %44 {offsets = [0, 72], sizes = [16, 8], strides = [1, 1]} : vector<16x96xf32> to vector<16x8xf32>
      %c1_44 = arith.constant 1 : index
      %c0_45 = arith.constant 0 : index
      %c0_46 = arith.constant 0 : index
      %69 = vector.load %arg10[%c1_44, %c0_45, %c0_46] : memref<4x16x8xf32, #tpu.memory_space<vmem>>, vector<1x16x8xf32>
      %70 = vector.shape_cast %69 : vector<1x16x8xf32> to vector<16x8xf32>
      %71 = vector.shape_cast %68 : vector<16x8xf32> to vector<1x16x8xf32>
      tpu.vector_store %arg10[%c1_44, %c0_45, %c0_46], %71 {strides = array<i32>} : memref<4x16x8xf32, #tpu.memory_space<vmem>>, vector<1x16x8xf32>,
      %72 = vector.extract_strided_slice %47 {offsets = [0, 16], sizes = [16, 8], strides = [1, 1]} : vector<16x32xf32> to vector<16x8xf32>
      %c2 = arith.constant 2 : index
      %c0_47 = arith.constant 0 : index
      %c0_48 = arith.constant 0 : index
      %73 = vector.load %arg8[%c2, %c0_47, %c0_48] : memref<4x16x8xf32, #tpu.memory_space<vmem>>, vector<1x16x8xf32>
      %74 = vector.shape_cast %73 : vector<1x16x8xf32> to vector<16x8xf32>
      %75 = vector.shape_cast %72 : vector<16x8xf32> to vector<1x16x8xf32>
      tpu.vector_store %arg8[%c2, %c0_47, %c0_48], %75 {strides = array<i32>} : memref<4x16x8xf32, #tpu.memory_space<vmem>>, vector<1x16x8xf32>,
      %76 = vector.extract_strided_slice %44 {offsets = [0, 48], sizes = [16, 8], strides = [1, 1]} : vector<16x96xf32> to vector<16x8xf32>
      %c2_49 = arith.constant 2 : index
      %c0_50 = arith.constant 0 : index
      %c0_51 = arith.constant 0 : index
      %77 = vector.load %arg9[%c2_49, %c0_50, %c0_51] : memref<4x16x8xf32, #tpu.memory_space<vmem>>, vector<1x16x8xf32>
      %78 = vector.shape_cast %77 : vector<1x16x8xf32> to vector<16x8xf32>
      %79 = vector.shape_cast %76 : vector<16x8xf32> to vector<1x16x8xf32>
      tpu.vector_store %arg9[%c2_49, %c0_50, %c0_51], %79 {strides = array<i32>} : memref<4x16x8xf32, #tpu.memory_space<vmem>>, vector<1x16x8xf32>,
      %80 = vector.extract_strided_slice %44 {offsets = [0, 80], sizes = [16, 8], strides = [1, 1]} : vector<16x96xf32> to vector<16x8xf32>
      %c2_52 = arith.constant 2 : index
      %c0_53 = arith.constant 0 : index
      %c0_54 = arith.constant 0 : index
      %81 = vector.load %arg10[%c2_52, %c0_53, %c0_54] : memref<4x16x8xf32, #tpu.memory_space<vmem>>, vector<1x16x8xf32>
      %82 = vector.shape_cast %81 : vector<1x16x8xf32> to vector<16x8xf32>
      %83 = vector.shape_cast %80 : vector<16x8xf32> to vector<1x16x8xf32>
      tpu.vector_store %arg10[%c2_52, %c0_53, %c0_54], %83 {strides = array<i32>} : memref<4x16x8xf32, #tpu.memory_space<vmem>>, vector<1x16x8xf32>,
      %84 = vector.extract_strided_slice %47 {offsets = [0, 24], sizes = [16, 8], strides = [1, 1]} : vector<16x32xf32> to vector<16x8xf32>
      %c3 = arith.constant 3 : index
      %c0_55 = arith.constant 0 : index
      %c0_56 = arith.constant 0 : index
      %85 = vector.load %arg8[%c3, %c0_55, %c0_56] : memref<4x16x8xf32, #tpu.memory_space<vmem>>, vector<1x16x8xf32>
      %86 = vector.shape_cast %85 : vector<1x16x8xf32> to vector<16x8xf32>
      %87 = vector.shape_cast %84 : vector<16x8xf32> to vector<1x16x8xf32>
      tpu.vector_store %arg8[%c3, %c0_55, %c0_56], %87 {strides = array<i32>} : memref<4x16x8xf32, #tpu.memory_space<vmem>>, vector<1x16x8xf32>,
      %88 = vector.extract_strided_slice %44 {offsets = [0, 56], sizes = [16, 8], strides = [1, 1]} : vector<16x96xf32> to vector<16x8xf32>
      %c3_57 = arith.constant 3 : index
      %c0_58 = arith.constant 0 : index
      %c0_59 = arith.constant 0 : index
      %89 = vector.load %arg9[%c3_57, %c0_58, %c0_59] : memref<4x16x8xf32, #tpu.memory_space<vmem>>, vector<1x16x8xf32>
      %90 = vector.shape_cast %89 : vector<1x16x8xf32> to vector<16x8xf32>
      %91 = vector.shape_cast %88 : vector<16x8xf32> to vector<1x16x8xf32>
      tpu.vector_store %arg9[%c3_57, %c0_58, %c0_59], %91 {strides = array<i32>} : memref<4x16x8xf32, #tpu.memory_space<vmem>>, vector<1x16x8xf32>,
      %92 = vector.extract_strided_slice %44 {offsets = [0, 88], sizes = [16, 8], strides = [1, 1]} : vector<16x96xf32> to vector<16x8xf32>
      %c3_60 = arith.constant 3 : index
      %c0_61 = arith.constant 0 : index
      %c0_62 = arith.constant 0 : index
      %93 = vector.load %arg10[%c3_60, %c0_61, %c0_62] : memref<4x16x8xf32, #tpu.memory_space<vmem>>, vector<1x16x8xf32>
      %94 = vector.shape_cast %93 : vector<1x16x8xf32> to vector<16x8xf32>
      %95 = vector.shape_cast %92 : vector<16x8xf32> to vector<1x16x8xf32>
      tpu.vector_store %arg10[%c3_60, %c0_61, %c0_62], %95 {strides = array<i32>} : memref<4x16x8xf32, #tpu.memory_space<vmem>>, vector<1x16x8xf32>,
    } else {
    }
    %c8_i32 = arith.constant 8 : i32
    %3 = arith.muli %arg1, %c8_i32 : i32
    %4 = tpu.assume_multiple %3, 8 : i32
    %c0 = arith.constant 0 : index
    %5 = arith.index_cast %4 : i32 to index
    %c0_1 = arith.constant 0 : index
    %6 = vector.load %arg8[%c0, %5, %c0_1] : memref<4x16x8xf32, #tpu.memory_space<vmem>>, vector<4x8x8xf32>
    %c0_2 = arith.constant 0 : index
    %c0_3 = arith.constant 0 : index
    %c0_4 = arith.constant 0 : index
    %7 = vector.load %arg9[%c0_2, %c0_3, %c0_4] : memref<4x16x8xf32, #tpu.memory_space<vmem>>, vector<4x16x8xf32>
    %c0_5 = arith.constant 0 : index
    %c0_6 = arith.constant 0 : index
    %c0_7 = arith.constant 0 : index
    %8 = vector.load %arg10[%c0_5, %c0_6, %c0_7] : memref<4x16x8xf32, #tpu.memory_space<vmem>>, vector<4x16x8xf32>
    "tpu.trace_start"() <{level = 10 : i32, message = "hqd,hkd->hqk"}> : () -> ()
    %cst = arith.constant dense<0.000000e+00> : vector<4x8x16xf32>
    %9 = tpu.matmul %6, %7, %cst {dimension_numbers = #tpu.dot_dimension_numbers<[2], [2], [1], [1], [0, 0, 0, 1, 1, 1], [0], [0]>} : vector<4x8x8xf32>, vector<4x16x8xf32>, vector<4x8x16xf32> -> vector<4x8x16xf32>
    "tpu.trace_stop"() : () -> ()
    %cst_8 = arith.constant dense<0xFF800000> : vector<4x8xf32>
    %10 = vector.multi_reduction <maximumf>, %9, %cst_8 [2] : vector<4x8x16xf32> to vector<4x8xf32>
    %11 = vector.shape_cast %10 : vector<4x8xf32> to vector<4x8x1xf32>
    %12 = vector.broadcast %11 : vector<4x8x1xf32> to vector<4x8x16xf32>
    %13 = arith.subf %9, %12 : vector<4x8x16xf32>
    %14 = math.exp %13 : vector<4x8x16xf32>
    %cst_9 = arith.constant dense<0.000000e+00> : vector<4x8xf32>
    %15 = vector.multi_reduction <add>, %14, %cst_9 [2] : vector<4x8x16xf32> to vector<4x8xf32>
    %16 = vector.shape_cast %15 : vector<4x8xf32> to vector<4x8x1xf32>
    %17 = tpu.reciprocal %16 : vector<4x8x1xf32> -> vector<4x8x1xf32>
    %18 = vector.broadcast %17 : vector<4x8x1xf32> to vector<4x8x16xf32>
    %19 = arith.mulf %14, %18 : vector<4x8x16xf32>
    %c0_10 = arith.constant 0 : index
    %c0_11 = arith.constant 0 : index
    %c0_12 = arith.constant 0 : index
    %c0_13 = arith.constant 0 : index
    %20 = vector.load %arg7[%c0_10, %c0_11, %c0_12, %c0_13] : memref<1x4x8x16xf32, #tpu.memory_space<vmem>>, vector<1x4x8x16xf32>
    %21 = vector.shape_cast %20 : vector<1x4x8x16xf32> to vector<4x8x16xf32>
    %22 = vector.shape_cast %19 : vector<4x8x16xf32> to vector<1x4x8x16xf32>
    tpu.vector_store %arg7[%c0_10, %c0_11, %c0_12, %c0_13], %22 {strides = array<i32>} : memref<1x4x8x16xf32, #tpu.memory_space<vmem>>, vector<1x4x8x16xf32>,
    "tpu.trace_start"() <{level = 10 : i32, message = "hqk,hkd->hqd"}> : () -> ()
    %cst_14 = arith.constant dense<0.000000e+00> : vector<4x8x8xf32>
    %23 = tpu.matmul %19, %8, %cst_14 {dimension_numbers = #tpu.dot_dimension_numbers<[2], [1], [1], [2], [0, 0, 0, 1, 1, 2], [0], [0]>} : vector<4x8x16xf32>, vector<4x16x8xf32>, vector<4x8x8xf32> -> vector<4x8x8xf32>
    "tpu.trace_stop"() : () -> ()
    %24 = vector.extract_strided_slice %23 {offsets = [0, 0, 0], sizes = [1, 8, 8], strides = [1, 1, 1]} : vector<4x8x8xf32> to vector<1x8x8xf32>
    %25 = vector.shape_cast %24 : vector<1x8x8xf32> to vector<8x8xf32>
    %26 = vector.extract_strided_slice %23 {offsets = [1, 0, 0], sizes = [1, 8, 8], strides = [1, 1, 1]} : vector<4x8x8xf32> to vector<1x8x8xf32>
    %27 = vector.shape_cast %26 : vector<1x8x8xf32> to vector<8x8xf32>
    %28 = vector.extract_strided_slice %23 {offsets = [2, 0, 0], sizes = [1, 8, 8], strides = [1, 1, 1]} : vector<4x8x8xf32> to vector<1x8x8xf32>
    %29 = vector.shape_cast %28 : vector<1x8x8xf32> to vector<8x8xf32>
    %30 = vector.extract_strided_slice %23 {offsets = [3, 0, 0], sizes = [1, 8, 8], strides = [1, 1, 1]} : vector<4x8x8xf32> to vector<1x8x8xf32>
    %31 = vector.shape_cast %30 : vector<1x8x8xf32> to vector<8x8xf32>
    %32 = tpu.concatenate %25, %27, %29, %31 in 1 : vector<8x8xf32>, vector<8x8xf32>, vector<8x8xf32>, vector<8x8xf32> -> vector<8x32xf32>
    %c0_15 = arith.constant 0 : index
    %c0_16 = arith.constant 0 : index
    %33 = vector.load %arg4[%c0_15, %c0_16] : memref<32x32xf32, #tpu.memory_space<vmem>>, vector<32x32xf32>
    %cst_17 = arith.constant dense<0.000000e+00> : vector<8x32xf32>
    %34 = tpu.matmul %32, %33, %cst_17 {dimension_numbers = #tpu.dot_dimension_numbers<[1], [0], [0], [1], [0, 0, 1, 1], [], []>} : vector<8x32xf32>, vector<32x32xf32>, vector<8x32xf32> -> vector<8x32xf32>
    %c0_18 = arith.constant 0 : index
    %c0_19 = arith.constant 0 : index
    %35 = vector.load %arg5[%c0_18, %c0_19] : memref<1x32xf32, #tpu.memory_space<vmem>>, vector<1x32xf32>
    %36 = vector.broadcast %35 : vector<1x32xf32> to vector<8x32xf32>
    %37 = arith.addf %34, %36 : vector<8x32xf32>
    %c0_20 = arith.constant 0 : index
    %c0_21 = arith.constant 0 : index
    %c0_22 = arith.constant 0 : index
    %38 = vector.load %arg6[%c0_20, %c0_21, %c0_22] : memref<1x8x32xf32, #tpu.memory_space<vmem>>, vector<1x8x32xf32>
    %39 = vector.shape_cast %38 : vector<1x8x32xf32> to vector<8x32xf32>
    %40 = vector.shape_cast %37 : vector<8x32xf32> to vector<1x8x32xf32>
    tpu.vector_store %arg6[%c0_20, %c0_21, %c0_22], %40 {strides = array<i32>} : memref<1x8x32xf32, #tpu.memory_space<vmem>>, vector<1x8x32xf32>,
    return
  }
  func.func @transform_0(%arg0: i32, %arg1: i32) -> (i32, i32, i32) {
    %c0_i32 = arith.constant 0 : i32
    %c0_i32_0 = arith.constant 0 : i32
    %c0_i32_1 = arith.constant 0 : i32
    return %arg0, %c0_i32, %c0_i32_0 : i32, i32, i32
  }
  func.func @transform_1(%arg0: i32, %arg1: i32) -> (i32, i32) {
    %c0_i32 = arith.constant 0 : i32
    %c0_i32_0 = arith.constant 0 : i32
    %c0_i32_1 = arith.constant 0 : i32
    return %c0_i32, %c0_i32_0 : i32, i32
  }
  func.func @transform_2(%arg0: i32, %arg1: i32) -> (i32, i32) {
    %c0_i32 = arith.constant 0 : i32
    %c0_i32_0 = arith.constant 0 : i32
    %c0_i32_1 = arith.constant 0 : i32
    return %c0_i32, %c0_i32_0 : i32, i32
  }
  func.func @transform_3(%arg0: i32, %arg1: i32) -> (i32, i32) {
    %c0_i32 = arith.constant 0 : i32
    %c0_i32_0 = arith.constant 0 : i32
    %c0_i32_1 = arith.constant 0 : i32
    return %c0_i32, %c0_i32_0 : i32, i32
  }
  func.func @transform_4(%arg0: i32, %arg1: i32) -> (i32, i32, i32) {
    %c0_i32 = arith.constant 0 : i32
    %c0_i32_0 = arith.constant 0 : i32
    return %arg0, %arg1, %c0_i32 : i32, i32, i32
  }
  func.func @transform_5(%arg0: i32, %arg1: i32) -> (i32, i32, i32, i32) {
    %c0_i32 = arith.constant 0 : i32
    %c0_i32_0 = arith.constant 0 : i32
    %c0_i32_1 = arith.constant 0 : i32
    return %arg0, %c0_i32, %arg1, %c0_i32_0 : i32, i32, i32, i32
  }
}

module attributes {stable_mosaic.version = 11 : i64} {
  func.func @attention_kernel(%arg0: i32, %arg1: i32, %arg2: memref<1x16x32xf32, #tpu.memory_space<vmem>>, %arg3: memref<32x96xf32, #tpu.memory_space<vmem>>, %arg4: memref<32x32xf32, #tpu.memory_space<vmem>>, %arg5: memref<1x32xf32, #tpu.memory_space<vmem>>, %arg6: memref<1x8x32xf32, #tpu.memory_space<vmem>>, %arg7: memref<1x4x8x16xf32, #tpu.memory_space<vmem>>, %arg8: memref<4x16x8xf32, #tpu.memory_space<vmem>>, %arg9: memref<4x16x8xf32, #tpu.memory_space<vmem>>, %arg10: memref<4x16x8xf32, #tpu.memory_space<vmem>>, %arg11: memref<8x32xf32, #tpu.memory_space<vmem>>) attributes {dimension_semantics = [#tpu.dimension_semantics<parallel>, #tpu.dimension_semantics<arbitrary>], iteration_bounds = array<i64: 2, 2>, scalar_prefetch = 0 : i64, scratch_operands = 4 : i64, tpu.core_type = #tpu.core_type<tc>, window_params = [{transform_indices = @transform_0, window_bounds = array<i64: 1, 16, 32>}, {pipeline_mode = #tpu.pipeline_mode<synchronous>, transform_indices = @transform_1, window_bounds = array<i64: 32, 96>}, {pipeline_mode = #tpu.pipeline_mode<synchronous>, transform_indices = @transform_2, window_bounds = array<i64: 32, 32>}, {pipeline_mode = #tpu.pipeline_mode<synchronous>, transform_indices = @transform_3, window_bounds = array<i64: 1, 32>}, {transform_indices = @transform_4, window_bounds = array<i64: 1, 8, 32>}, {transform_indices = @transform_5, window_bounds = array<i64: 1, 4, 8, 16>}]} {
    %c0_i32 = arith.constant 0 : i32
    %0 = arith.cmpi eq, %arg1, %c0_i32 : i32
    %1 = arith.extui %0 : i1 to i32
    %c0_i32_0 = arith.constant 0 : i32
    %2 = arith.cmpi ne, %1, %c0_i32_0 : i32
    scf.if %2 {
      %c0_30 = arith.constant 0 : index
      %c0_31 = arith.constant 0 : index
      %c0_32 = arith.constant 0 : index
      %45 = vector.load %arg2[%c0_30, %c0_31, %c0_32] : memref<1x16x32xf32, #tpu.memory_space<vmem>>, vector<1x16x32xf32>
      %46 = vector.shape_cast %45 : vector<1x16x32xf32> to vector<16x32xf32>
      %c0_33 = arith.constant 0 : index
      %c0_34 = arith.constant 0 : index
      %47 = vector.load %arg3[%c0_33, %c0_34] : memref<32x96xf32, #tpu.memory_space<vmem>>, vector<32x96xf32>
      %cst_35 = arith.constant dense<0.000000e+00> : vector<16x96xf32>
      %48 = tpu.matmul %46, %47, %cst_35 {dimension_numbers = #tpu.dot_dimension_numbers<[1], [0], [0], [1], [0, 0, 1, 1], [], []>} : vector<16x32xf32>, vector<32x96xf32>, vector<16x96xf32> -> vector<16x96xf32>
      %49 = vector.extract_strided_slice %48 {offsets = [0, 0], sizes = [16, 32], strides = [1, 1]} : vector<16x96xf32> to vector<16x32xf32>
      %cst_36 = arith.constant 0.353553385 : f32
      %50 = vector.broadcast %cst_36 : f32 to vector<16x32xf32>
      %51 = arith.mulf %49, %50 : vector<16x32xf32>
      %52 = vector.extract_strided_slice %51 {offsets = [0, 0], sizes = [16, 8], strides = [1, 1]} : vector<16x32xf32> to vector<16x8xf32>
      %c0_37 = arith.constant 0 : index
      %c0_38 = arith.constant 0 : index
      %c0_39 = arith.constant 0 : index
      %53 = vector.load %arg8[%c0_37, %c0_38, %c0_39] : memref<4x16x8xf32, #tpu.memory_space<vmem>>, vector<1x16x8xf32>
      %54 = vector.shape_cast %53 : vector<1x16x8xf32> to vector<16x8xf32>
      %55 = vector.shape_cast %52 : vector<16x8xf32> to vector<1x16x8xf32>
      tpu.vector_store %arg8[%c0_37, %c0_38, %c0_39], %55 {strides = array<i32>} : memref<4x16x8xf32, #tpu.memory_space<vmem>>, vector<1x16x8xf32>,
      %56 = vector.extract_strided_slice %48 {offsets = [0, 32], sizes = [16, 8], strides = [1, 1]} : vector<16x96xf32> to vector<16x8xf32>
      %c0_40 = arith.constant 0 : index
      %c0_41 = arith.constant 0 : index
      %c0_42 = arith.constant 0 : index
      %57 = vector.load %arg9[%c0_40, %c0_41, %c0_42] : memref<4x16x8xf32, #tpu.memory_space<vmem>>, vector<1x16x8xf32>
      %58 = vector.shape_cast %57 : vector<1x16x8xf32> to vector<16x8xf32>
      %59 = vector.shape_cast %56 : vector<16x8xf32> to vector<1x16x8xf32>
      tpu.vector_store %arg9[%c0_40, %c0_41, %c0_42], %59 {strides = array<i32>} : memref<4x16x8xf32, #tpu.memory_space<vmem>>, vector<1x16x8xf32>,
      %60 = vector.extract_strided_slice %48 {offsets = [0, 64], sizes = [16, 8], strides = [1, 1]} : vector<16x96xf32> to vector<16x8xf32>
      %c0_43 = arith.constant 0 : index
      %c0_44 = arith.constant 0 : index
      %c0_45 = arith.constant 0 : index
      %61 = vector.load %arg10[%c0_43, %c0_44, %c0_45] : memref<4x16x8xf32, #tpu.memory_space<vmem>>, vector<1x16x8xf32>
      %62 = vector.shape_cast %61 : vector<1x16x8xf32> to vector<16x8xf32>
      %63 = vector.shape_cast %60 : vector<16x8xf32> to vector<1x16x8xf32>
      tpu.vector_store %arg10[%c0_43, %c0_44, %c0_45], %63 {strides = array<i32>} : memref<4x16x8xf32, #tpu.memory_space<vmem>>, vector<1x16x8xf32>,
      %64 = vector.extract_strided_slice %51 {offsets = [0, 8], sizes = [16, 8], strides = [1, 1]} : vector<16x32xf32> to vector<16x8xf32>
      %c1 = arith.constant 1 : index
      %c0_46 = arith.constant 0 : index
      %c0_47 = arith.constant 0 : index
      %65 = vector.load %arg8[%c1, %c0_46, %c0_47] : memref<4x16x8xf32, #tpu.memory_space<vmem>>, vector<1x16x8xf32>
      %66 = vector.shape_cast %65 : vector<1x16x8xf32> to vector<16x8xf32>
      %67 = vector.shape_cast %64 : vector<16x8xf32> to vector<1x16x8xf32>
      tpu.vector_store %arg8[%c1, %c0_46, %c0_47], %67 {strides = array<i32>} : memref<4x16x8xf32, #tpu.memory_space<vmem>>, vector<1x16x8xf32>,
      %68 = vector.extract_strided_slice %48 {offsets = [0, 40], sizes = [16, 8], strides = [1, 1]} : vector<16x96xf32> to vector<16x8xf32>
      %c1_48 = arith.constant 1 : index
      %c0_49 = arith.constant 0 : index
      %c0_50 = arith.constant 0 : index
      %69 = vector.load %arg9[%c1_48, %c0_49, %c0_50] : memref<4x16x8xf32, #tpu.memory_space<vmem>>, vector<1x16x8xf32>
      %70 = vector.shape_cast %69 : vector<1x16x8xf32> to vector<16x8xf32>
      %71 = vector.shape_cast %68 : vector<16x8xf32> to vector<1x16x8xf32>
      tpu.vector_store %arg9[%c1_48, %c0_49, %c0_50], %71 {strides = array<i32>} : memref<4x16x8xf32, #tpu.memory_space<vmem>>, vector<1x16x8xf32>,
      %72 = vector.extract_strided_slice %48 {offsets = [0, 72], sizes = [16, 8], strides = [1, 1]} : vector<16x96xf32> to vector<16x8xf32>
      %c1_51 = arith.constant 1 : index
      %c0_52 = arith.constant 0 : index
      %c0_53 = arith.constant 0 : index
      %73 = vector.load %arg10[%c1_51, %c0_52, %c0_53] : memref<4x16x8xf32, #tpu.memory_space<vmem>>, vector<1x16x8xf32>
      %74 = vector.shape_cast %73 : vector<1x16x8xf32> to vector<16x8xf32>
      %75 = vector.shape_cast %72 : vector<16x8xf32> to vector<1x16x8xf32>
      tpu.vector_store %arg10[%c1_51, %c0_52, %c0_53], %75 {strides = array<i32>} : memref<4x16x8xf32, #tpu.memory_space<vmem>>, vector<1x16x8xf32>,
      %76 = vector.extract_strided_slice %51 {offsets = [0, 16], sizes = [16, 8], strides = [1, 1]} : vector<16x32xf32> to vector<16x8xf32>
      %c2 = arith.constant 2 : index
      %c0_54 = arith.constant 0 : index
      %c0_55 = arith.constant 0 : index
      %77 = vector.load %arg8[%c2, %c0_54, %c0_55] : memref<4x16x8xf32, #tpu.memory_space<vmem>>, vector<1x16x8xf32>
      %78 = vector.shape_cast %77 : vector<1x16x8xf32> to vector<16x8xf32>
      %79 = vector.shape_cast %76 : vector<16x8xf32> to vector<1x16x8xf32>
      tpu.vector_store %arg8[%c2, %c0_54, %c0_55], %79 {strides = array<i32>} : memref<4x16x8xf32, #tpu.memory_space<vmem>>, vector<1x16x8xf32>,
      %80 = vector.extract_strided_slice %48 {offsets = [0, 48], sizes = [16, 8], strides = [1, 1]} : vector<16x96xf32> to vector<16x8xf32>
      %c2_56 = arith.constant 2 : index
      %c0_57 = arith.constant 0 : index
      %c0_58 = arith.constant 0 : index
      %81 = vector.load %arg9[%c2_56, %c0_57, %c0_58] : memref<4x16x8xf32, #tpu.memory_space<vmem>>, vector<1x16x8xf32>
      %82 = vector.shape_cast %81 : vector<1x16x8xf32> to vector<16x8xf32>
      %83 = vector.shape_cast %80 : vector<16x8xf32> to vector<1x16x8xf32>
      tpu.vector_store %arg9[%c2_56, %c0_57, %c0_58], %83 {strides = array<i32>} : memref<4x16x8xf32, #tpu.memory_space<vmem>>, vector<1x16x8xf32>,
      %84 = vector.extract_strided_slice %48 {offsets = [0, 80], sizes = [16, 8], strides = [1, 1]} : vector<16x96xf32> to vector<16x8xf32>
      %c2_59 = arith.constant 2 : index
      %c0_60 = arith.constant 0 : index
      %c0_61 = arith.constant 0 : index
      %85 = vector.load %arg10[%c2_59, %c0_60, %c0_61] : memref<4x16x8xf32, #tpu.memory_space<vmem>>, vector<1x16x8xf32>
      %86 = vector.shape_cast %85 : vector<1x16x8xf32> to vector<16x8xf32>
      %87 = vector.shape_cast %84 : vector<16x8xf32> to vector<1x16x8xf32>
      tpu.vector_store %arg10[%c2_59, %c0_60, %c0_61], %87 {strides = array<i32>} : memref<4x16x8xf32, #tpu.memory_space<vmem>>, vector<1x16x8xf32>,
      %88 = vector.extract_strided_slice %51 {offsets = [0, 24], sizes = [16, 8], strides = [1, 1]} : vector<16x32xf32> to vector<16x8xf32>
      %c3 = arith.constant 3 : index
      %c0_62 = arith.constant 0 : index
      %c0_63 = arith.constant 0 : index
      %89 = vector.load %arg8[%c3, %c0_62, %c0_63] : memref<4x16x8xf32, #tpu.memory_space<vmem>>, vector<1x16x8xf32>
      %90 = vector.shape_cast %89 : vector<1x16x8xf32> to vector<16x8xf32>
      %91 = vector.shape_cast %88 : vector<16x8xf32> to vector<1x16x8xf32>
      tpu.vector_store %arg8[%c3, %c0_62, %c0_63], %91 {strides = array<i32>} : memref<4x16x8xf32, #tpu.memory_space<vmem>>, vector<1x16x8xf32>,
      %92 = vector.extract_strided_slice %48 {offsets = [0, 56], sizes = [16, 8], strides = [1, 1]} : vector<16x96xf32> to vector<16x8xf32>
      %c3_64 = arith.constant 3 : index
      %c0_65 = arith.constant 0 : index
      %c0_66 = arith.constant 0 : index
      %93 = vector.load %arg9[%c3_64, %c0_65, %c0_66] : memref<4x16x8xf32, #tpu.memory_space<vmem>>, vector<1x16x8xf32>
      %94 = vector.shape_cast %93 : vector<1x16x8xf32> to vector<16x8xf32>
      %95 = vector.shape_cast %92 : vector<16x8xf32> to vector<1x16x8xf32>
      tpu.vector_store %arg9[%c3_64, %c0_65, %c0_66], %95 {strides = array<i32>} : memref<4x16x8xf32, #tpu.memory_space<vmem>>, vector<1x16x8xf32>,
      %96 = vector.extract_strided_slice %48 {offsets = [0, 88], sizes = [16, 8], strides = [1, 1]} : vector<16x96xf32> to vector<16x8xf32>
      %c3_67 = arith.constant 3 : index
      %c0_68 = arith.constant 0 : index
      %c0_69 = arith.constant 0 : index
      %97 = vector.load %arg10[%c3_67, %c0_68, %c0_69] : memref<4x16x8xf32, #tpu.memory_space<vmem>>, vector<1x16x8xf32>
      %98 = vector.shape_cast %97 : vector<1x16x8xf32> to vector<16x8xf32>
      %99 = vector.shape_cast %96 : vector<16x8xf32> to vector<1x16x8xf32>
      tpu.vector_store %arg10[%c3_67, %c0_68, %c0_69], %99 {strides = array<i32>} : memref<4x16x8xf32, #tpu.memory_space<vmem>>, vector<1x16x8xf32>,
    } else {
    }
    %c8_i32 = arith.constant 8 : i32
    %3 = arith.muli %arg1, %c8_i32 : i32
    %4 = tpu.assume_multiple %3, 8 : i32
    %c0 = arith.constant 0 : index
    %5 = arith.index_cast %4 : i32 to index
    %c0_1 = arith.constant 0 : index
    %6 = vector.load %arg8[%c0, %5, %c0_1] : memref<4x16x8xf32, #tpu.memory_space<vmem>>, vector<4x8x8xf32>
    %c0_2 = arith.constant 0 : index
    %c0_3 = arith.constant 0 : index
    %c0_4 = arith.constant 0 : index
    %7 = vector.load %arg9[%c0_2, %c0_3, %c0_4] : memref<4x16x8xf32, #tpu.memory_space<vmem>>, vector<4x16x8xf32>
    %c0_5 = arith.constant 0 : index
    %c0_6 = arith.constant 0 : index
    %c0_7 = arith.constant 0 : index
    %8 = vector.load %arg10[%c0_5, %c0_6, %c0_7] : memref<4x16x8xf32, #tpu.memory_space<vmem>>, vector<4x16x8xf32>
    "tpu.trace_start"() <{level = 10 : i32, message = "hqd,hkd->hqk"}> : () -> ()
    %cst = arith.constant dense<0.000000e+00> : vector<4x8x16xf32>
    %9 = tpu.matmul %6, %7, %cst {dimension_numbers = #tpu.dot_dimension_numbers<[2], [2], [1], [1], [0, 0, 0, 1, 1, 1], [0], [0]>} : vector<4x8x8xf32>, vector<4x16x8xf32>, vector<4x8x16xf32> -> vector<4x8x16xf32>
    "tpu.trace_stop"() : () -> ()
    %cst_8 = arith.constant dense<0xFF800000> : vector<4x8xf32>
    %10 = vector.multi_reduction <maximumf>, %9, %cst_8 [2] : vector<4x8x16xf32> to vector<4x8xf32>
    %11 = vector.shape_cast %10 : vector<4x8xf32> to vector<4x8x1xf32>
    %12 = vector.broadcast %11 : vector<4x8x1xf32> to vector<4x8x16xf32>
    %13 = arith.subf %9, %12 : vector<4x8x16xf32>
    %14 = math.exp %13 : vector<4x8x16xf32>
    %cst_9 = arith.constant dense<0.000000e+00> : vector<4x8xf32>
    %15 = vector.multi_reduction <add>, %14, %cst_9 [2] : vector<4x8x16xf32> to vector<4x8xf32>
    %16 = vector.shape_cast %15 : vector<4x8xf32> to vector<4x8x1xf32>
    %17 = tpu.reciprocal %16 : vector<4x8x1xf32> -> vector<4x8x1xf32>
    %18 = vector.broadcast %17 : vector<4x8x1xf32> to vector<4x8x16xf32>
    %19 = arith.mulf %14, %18 : vector<4x8x16xf32>
    %c0_10 = arith.constant 0 : index
    %c0_11 = arith.constant 0 : index
    %c0_12 = arith.constant 0 : index
    %c0_13 = arith.constant 0 : index
    %20 = vector.load %arg7[%c0_10, %c0_11, %c0_12, %c0_13] : memref<1x4x8x16xf32, #tpu.memory_space<vmem>>, vector<1x4x8x16xf32>
    %21 = vector.shape_cast %20 : vector<1x4x8x16xf32> to vector<4x8x16xf32>
    %22 = vector.shape_cast %19 : vector<4x8x16xf32> to vector<1x4x8x16xf32>
    tpu.vector_store %arg7[%c0_10, %c0_11, %c0_12, %c0_13], %22 {strides = array<i32>} : memref<1x4x8x16xf32, #tpu.memory_space<vmem>>, vector<1x4x8x16xf32>,
    "tpu.trace_start"() <{level = 10 : i32, message = "hqk,hkd->hqd"}> : () -> ()
    %cst_14 = arith.constant dense<0.000000e+00> : vector<4x8x8xf32>
    %23 = tpu.matmul %19, %8, %cst_14 {dimension_numbers = #tpu.dot_dimension_numbers<[2], [1], [1], [2], [0, 0, 0, 1, 1, 2], [0], [0]>} : vector<4x8x16xf32>, vector<4x16x8xf32>, vector<4x8x8xf32> -> vector<4x8x8xf32>
    "tpu.trace_stop"() : () -> ()
    %24 = vector.extract_strided_slice %23 {offsets = [0, 0, 0], sizes = [1, 8, 8], strides = [1, 1, 1]} : vector<4x8x8xf32> to vector<1x8x8xf32>
    %25 = vector.shape_cast %24 : vector<1x8x8xf32> to vector<8x8xf32>
    %c0_15 = arith.constant 0 : index
    %c0_16 = arith.constant 0 : index
    %26 = vector.load %arg11[%c0_15, %c0_16] : memref<8x32xf32, #tpu.memory_space<vmem>>, vector<8x8xf32>
    tpu.vector_store %arg11[%c0_15, %c0_16], %25 {strides = array<i32>} : memref<8x32xf32, #tpu.memory_space<vmem>>, vector<8x8xf32>,
    %27 = vector.extract_strided_slice %23 {offsets = [1, 0, 0], sizes = [1, 8, 8], strides = [1, 1, 1]} : vector<4x8x8xf32> to vector<1x8x8xf32>
    %28 = vector.shape_cast %27 : vector<1x8x8xf32> to vector<8x8xf32>
    %c0_17 = arith.constant 0 : index
    %c8 = arith.constant 8 : index
    %29 = vector.load %arg11[%c0_17, %c8] : memref<8x32xf32, #tpu.memory_space<vmem>>, vector<8x8xf32>
    tpu.vector_store %arg11[%c0_17, %c8], %28 {strides = array<i32>} : memref<8x32xf32, #tpu.memory_space<vmem>>, vector<8x8xf32>,
    %30 = vector.extract_strided_slice %23 {offsets = [2, 0, 0], sizes = [1, 8, 8], strides = [1, 1, 1]} : vector<4x8x8xf32> to vector<1x8x8xf32>
    %31 = vector.shape_cast %30 : vector<1x8x8xf32> to vector<8x8xf32>
    %c0_18 = arith.constant 0 : index
    %c16 = arith.constant 16 : index
    %32 = vector.load %arg11[%c0_18, %c16] : memref<8x32xf32, #tpu.memory_space<vmem>>, vector<8x8xf32>
    tpu.vector_store %arg11[%c0_18, %c16], %31 {strides = array<i32>} : memref<8x32xf32, #tpu.memory_space<vmem>>, vector<8x8xf32>,
    %33 = vector.extract_strided_slice %23 {offsets = [3, 0, 0], sizes = [1, 8, 8], strides = [1, 1, 1]} : vector<4x8x8xf32> to vector<1x8x8xf32>
    %34 = vector.shape_cast %33 : vector<1x8x8xf32> to vector<8x8xf32>
    %c0_19 = arith.constant 0 : index
    %c24 = arith.constant 24 : index
    %35 = vector.load %arg11[%c0_19, %c24] : memref<8x32xf32, #tpu.memory_space<vmem>>, vector<8x8xf32>
    tpu.vector_store %arg11[%c0_19, %c24], %34 {strides = array<i32>} : memref<8x32xf32, #tpu.memory_space<vmem>>, vector<8x8xf32>,
    %c0_20 = arith.constant 0 : index
    %c0_21 = arith.constant 0 : index
    %36 = vector.load %arg11[%c0_20, %c0_21] : memref<8x32xf32, #tpu.memory_space<vmem>>, vector<8x32xf32>
    %c0_22 = arith.constant 0 : index
    %c0_23 = arith.constant 0 : index
    %37 = vector.load %arg4[%c0_22, %c0_23] : memref<32x32xf32, #tpu.memory_space<vmem>>, vector<32x32xf32>
    %cst_24 = arith.constant dense<0.000000e+00> : vector<8x32xf32>
    %38 = tpu.matmul %36, %37, %cst_24 {dimension_numbers = #tpu.dot_dimension_numbers<[1], [0], [0], [1], [0, 0, 1, 1], [], []>} : vector<8x32xf32>, vector<32x32xf32>, vector<8x32xf32> -> vector<8x32xf32>
    %c0_25 = arith.constant 0 : index
    %c0_26 = arith.constant 0 : index
    %39 = vector.load %arg5[%c0_25, %c0_26] : memref<1x32xf32, #tpu.memory_space<vmem>>, vector<1x32xf32>
    %40 = vector.broadcast %39 : vector<1x32xf32> to vector<8x32xf32>
    %41 = arith.addf %38, %40 : vector<8x32xf32>
    %c0_27 = arith.constant 0 : index
    %c0_28 = arith.constant 0 : index
    %c0_29 = arith.constant 0 : index
    %42 = vector.load %arg6[%c0_27, %c0_28, %c0_29] : memref<1x8x32xf32, #tpu.memory_space<vmem>>, vector<1x8x32xf32>
    %43 = vector.shape_cast %42 : vector<1x8x32xf32> to vector<8x32xf32>
    %44 = vector.shape_cast %41 : vector<8x32xf32> to vector<1x8x32xf32>
    tpu.vector_store %arg6[%c0_27, %c0_28, %c0_29], %44 {strides = array<i32>} : memref<1x8x32xf32, #tpu.memory_space<vmem>>, vector<1x8x32xf32>,
    return
  }
  func.func @transform_0(%arg0: i32, %arg1: i32) -> (i32, i32, i32) {
    %c0_i32 = arith.constant 0 : i32
    %c0_i32_0 = arith.constant 0 : i32
    %c0_i32_1 = arith.constant 0 : i32
    return %arg0, %c0_i32, %c0_i32_0 : i32, i32, i32
  }
  func.func @transform_1(%arg0: i32, %arg1: i32) -> (i32, i32) {
    %c0_i32 = arith.constant 0 : i32
    %c0_i32_0 = arith.constant 0 : i32
    %c0_i32_1 = arith.constant 0 : i32
    return %c0_i32, %c0_i32_0 : i32, i32
  }
  func.func @transform_2(%arg0: i32, %arg1: i32) -> (i32, i32) {
    %c0_i32 = arith.constant 0 : i32
    %c0_i32_0 = arith.constant 0 : i32
    %c0_i32_1 = arith.constant 0 : i32
    return %c0_i32, %c0_i32_0 : i32, i32
  }
  func.func @transform_3(%arg0: i32, %arg1: i32) -> (i32, i32) {
    %c0_i32 = arith.constant 0 : i32
    %c0_i32_0 = arith.constant 0 : i32
    %c0_i32_1 = arith.constant 0 : i32
    return %c0_i32, %c0_i32_0 : i32, i32
  }
  func.func @transform_4(%arg0: i32, %arg1: i32) -> (i32, i32, i32) {
    %c0_i32 = arith.constant 0 : i32
    %c0_i32_0 = arith.constant 0 : i32
    return %arg0, %arg1, %c0_i32 : i32, i32, i32
  }
  func.func @transform_5(%arg0: i32, %arg1: i32) -> (i32, i32, i32, i32) {
    %c0_i32 = arith.constant 0 : i32
    %c0_i32_0 = arith.constant 0 : i32
    %c0_i32_1 = arith.constant 0 : i32
    return %arg0, %c0_i32, %arg1, %c0_i32_0 : i32, i32, i32, i32
  }
}

</mosaic_0001>

<llo_original>
// kernel: tpu_custom_call.1
$region0: #{tpu_custom_call.1}
  #allocation0 [shape = 'u32[]', space=smem, size = 0x4, offset = 0x4, fixed_abs, tag = 'smem constant byte address 0x4 - core index']
  #allocation1 [shape = 'u32[72,128]{1,0:T(1,128)}', space=vmem, size = 0x9000, scoped, tag = 'internal scratch']
  #allocation2 [shape = 'f32[4,16,8]{2,1,0:T(8,128)}', space=vmem, size = 0x8000, scoped, tag = 'scratch operand']
  #allocation3 [shape = 'f32[4,16,8]{2,1,0:T(8,128)}', space=vmem, size = 0x8000, scoped, tag = 'scratch operand']
  #allocation4 [shape = 'f32[4,16,8]{2,1,0:T(8,128)}', space=vmem, size = 0x8000, scoped, tag = 'scratch operand']
  %s0 = inlined_call_operand.hbm [shape: f32[2,16,32], index: 0, kind: input, shape index: {}]
  %s1 = inlined_call_operand.hbm [shape: f32[32,96], index: 1, kind: input, shape index: {}]
  %s2 = inlined_call_operand.hbm [shape: f32[32,32], index: 2, kind: input, shape index: {}]
  %s3 = inlined_call_operand.vmem [shape: f32[1,32], index: 3, kind: input, shape index: {}]
  %s4 = inlined_call_operand.hbm [shape: f32[2,16,32], index: 4, kind: output, shape index: {0}]
  %s5 = inlined_call_operand.hbm [shape: f32[2,4,16,16], index: 5, kind: output, shape index: {1}]
  %6 = xla_tuple %s4, %s5
  %s7 = sld [smem:[#allocation0]]
  $region73: #{tpu_custom_call.1} parent=0
    _
  %s9 = ssub.s32 1, %s7
  %s10 = scalar_select 0, %s9, %s7
  $region1: #{tpu_custom_call.1} parent=0
    #allocation5 [shape = 'u8[16384]{0}', space=vmem, size = 0x4000, scoped, tag = 'input window, operand 0']
    #allocation6 [shape = 's32[2]{0}', space=sflag, size = 0x8, scoped, tag = 'scoped memory for tpu_custom_call.1']
    #allocation7 [shape = 's32[2]{0}', space=sflag, size = 0x8, scoped, tag = 'scoped memory for tpu_custom_call.1']
    #allocation8 [shape = 'u8[16384]{0}', space=vmem, size = 0x4000, scoped, tag = 'input window, operand 1, single buffered']
    #allocation9 [shape = 's32[1]{0}', space=sflag, size = 0x4, scoped, tag = 'scoped memory for tpu_custom_call.1']
    #allocation10 [shape = 'u8[16384]{0}', space=vmem, size = 0x4000, scoped, tag = 'input window, operand 2, single buffered']
    #allocation11 [shape = 'u8[8192]{0}', space=vmem, size = 0x2000, scoped, tag = 'output window, operand 0']
    #allocation12 [shape = 'u8[32768]{0}', space=vmem, size = 0x8000, scoped, tag = 'output window, operand 1']
    #allocation13 [shape = 's32[2]{0}', space=sflag, size = 0x8, scoped, tag = 'scoped memory for tpu_custom_call.1']
    %11 = vsyncpa [#allocation6], 0
    %s12 = scalar_lea.sflag [#allocation6], 1
    %13 = vsyncpa %s12, 0
    %14 = vsyncpa [#allocation9], 0
    %15 = vsyncpa [#allocation7], 0
    %s16 = scalar_lea.sflag [#allocation7], 1
    %17 = vsyncpa %s16, 0
    %18 = vsyncpa [#allocation13], 0
    %s19 = scalar_lea.sflag [#allocation13], 1
    %20 = vsyncpa %s19, 0
    loop: start=0, step=1, limit=6
    $region2: #{tpu_custom_call.1} parent=1 // loop_pre_header
      _
    $region3: #{tpu_custom_call.1} parent=1 // loop_header
      %s22 = sphi 0, %s26
      %p23 = scmp.ge.s32.totalorder %s22, 6
      %s29 = sphi 0, %s41
      %s30 = sphi 0, %s37
      %s31 = sphi 0, %s29
      %s32 = sphi 0, %s30
      %s33 = sphi 0, %s31
      %s34 = sphi 0, %s32
      %s44 = sphi 0, %s46
      %s47 = sphi 0, %s44
      %s48 = sphi 0, %s47
      %s64 = sphi 0, %s48
      %s68 = sphi 0, %s68
      %s70 = sphi 0, %s68
      %s71 = sphi 0, %s70
      %s85 = sphi 0, %s71
      %s89 = sphi 0, %s89
      %s91 = sphi 0, %s89
      %s92 = sphi 0, %s91
      %s106 = sphi 0, %s92
      %s110 = sphi 0, %s110
      %s112 = sphi 0, %s110
      %s113 = sphi 0, %s112
      %s127 = sphi 0, %s113
      %s135 = sphi 0, %s137
      %s138 = sphi 0, %s135
      %s139 = sphi 0, %s138
      %s155 = sphi 0, %s139
      %s163 = sphi 0, %s165
      %s166 = sphi 0, %s163
      %s167 = sphi 0, %s166
      %s183 = sphi 0, %s167
    $region4: #{tpu_custom_call.1} parent=1 // loop_header_branch
      %25 = sbr.rel (%p23) target = $region8
    $region5: #{tpu_custom_call.1} parent=1 // loop_body
      %s27 = ssub.s32 %s22, 1
      %s28 = ssub.s32 %s22, 2
      %s35 = sadd.s32 1, %s30
      %p36 = scmp.ge.s32.totalorder %s35, 2
      %s37 = scalar_select %p36, 0, %s35
      %s38 = sadd.s32 1, %s29
      %s39 = scalar_select %p36, %s38, %s29
      %p40 = scmp.ge.s32.totalorder %s39, 2
      %s41 = scalar_select %p40, 0, %s39
      %s42 = ssub.s32 %s29, %s41
      %p43 = scmp.eq.s32.totalorder %s42, 0
      %s45 = sadd.s32 %s44, 1
      %s46 = scalar_select %p43, %s44, %s45
      %p49 = pneg %p43
      %p50 = scmp.eq.s32.totalorder %s22, 3
      %p51 = por %p49, %p50
      %p52 = scmp.ne.s32.totalorder %s44, %s47
      %p53 = scmp.eq.s32.totalorder %s22, 0
      %p54 = por %p52, %p53
      %p55 = scmp.ne.s32.totalorder %s44, %s47
      %p56 = scmp.eq.s32.totalorder %s27, 3
      %p57 = por %p55, %p56
      %p58 = scmp.ne.s32.totalorder %s47, %s48
      %p59 = scmp.eq.s32.totalorder %s27, 0
      %p60 = por %p58, %p59
      %p61 = scmp.ne.s32.totalorder %s47, %s48
      %p62 = scmp.eq.s32.totalorder %s28, 3
      %p63 = por %p61, %p62
      %p65 = scmp.ne.s32.totalorder %s48, %s64
      %p66 = scmp.eq.s32.totalorder %s28, 0
      %p67 = por %p65, %p66
      %s69 = sadd.s32 %s68, 1
      %p72 = scmp.eq.s32.totalorder %s22, 3
      %p73 = scmp.ne.s32.totalorder %s68, %s70
      %p74 = scmp.eq.s32.totalorder %s22, 0
      %p75 = por %p73, %p74
      %p76 = scmp.ne.s32.totalorder %s68, %s70
      %p77 = scmp.eq.s32.totalorder %s27, 3
      %p78 = por %p76, %p77
      %p79 = scmp.ne.s32.totalorder %s70, %s71
      %p80 = scmp.eq.s32.totalorder %s27, 0
      %p81 = por %p79, %p80
      %p82 = scmp.ne.s32.totalorder %s70, %s71
      %p83 = scmp.eq.s32.totalorder %s28, 3
      %p84 = por %p82, %p83
      %p86 = scmp.ne.s32.totalorder %s71, %s85
      %p87 = scmp.eq.s32.totalorder %s28, 0
      %p88 = por %p86, %p87
      %s90 = sadd.s32 %s89, 1
      %p93 = scmp.eq.s32.totalorder %s22, 3
      %p94 = scmp.ne.s32.totalorder %s89, %s91
      %p95 = scmp.eq.s32.totalorder %s22, 0
      %p96 = por %p94, %p95
      %p97 = scmp.ne.s32.totalorder %s89, %s91
      %p98 = scmp.eq.s32.totalorder %s27, 3
      %p99 = por %p97, %p98
      %p100 = scmp.ne.s32.totalorder %s91, %s92
      %p101 = scmp.eq.s32.totalorder %s27, 0
      %p102 = por %p100, %p101
      %p103 = scmp.ne.s32.totalorder %s91, %s92
      %p104 = scmp.eq.s32.totalorder %s28, 3
      %p105 = por %p103, %p104
      %p107 = scmp.ne.s32.totalorder %s92, %s106
      %p108 = scmp.eq.s32.totalorder %s28, 0
      %p109 = por %p107, %p108
      %s111 = sadd.s32 %s110, 1
      %p114 = scmp.eq.s32.totalorder %s22, 3
      %p115 = scmp.ne.s32.totalorder %s110, %s112
      %p116 = scmp.eq.s32.totalorder %s22, 0
      %p117 = por %p115, %p116
      %p118 = scmp.ne.s32.totalorder %s110, %s112
      %p119 = scmp.eq.s32.totalorder %s27, 3
      %p120 = por %p118, %p119
      %p121 = scmp.ne.s32.totalorder %s112, %s113
      %p122 = scmp.eq.s32.totalorder %s27, 0
      %p123 = por %p121, %p122
      %p124 = scmp.ne.s32.totalorder %s112, %s113
      %p125 = scmp.eq.s32.totalorder %s28, 3
      %p126 = por %p124, %p125
      %p128 = scmp.ne.s32.totalorder %s113, %s127
      %p129 = scmp.eq.s32.totalorder %s28, 0
      %p130 = por %p128, %p129
      %s131 = ssub.s32 %s29, %s41
      %s132 = ssub.s32 %s30, %s37
      %s133 = sor.u32 %s131, %s132
      %p134 = scmp.eq.s32.totalorder %s133, 0
      %s136 = sadd.s32 %s135, 1
      %s137 = scalar_select %p134, %s135, %s136
      %p140 = pneg %p134
      %p141 = scmp.eq.s32.totalorder %s22, 3
      %p142 = por %p140, %p141
      %p143 = scmp.ne.s32.totalorder %s135, %s138
      %p144 = scmp.eq.s32.totalorder %s22, 0
      %p145 = por %p143, %p144
      %p146 = scmp.ne.s32.totalorder %s135, %s138
      %p147 = scmp.eq.s32.totalorder %s27, 3
      %p148 = por %p146, %p147
      %p149 = scmp.ne.s32.totalorder %s138, %s139
      %p150 = scmp.eq.s32.totalorder %s27, 0
      %p151 = por %p149, %p150
      %p152 = scmp.ne.s32.totalorder %s138, %s139
      %p153 = scmp.eq.s32.totalorder %s28, 3
      %p154 = por %p152, %p153
      %p156 = scmp.ne.s32.totalorder %s139, %s155
      %p157 = scmp.eq.s32.totalorder %s28, 0
      %p158 = por %p156, %p157
      %s159 = ssub.s32 %s29, %s41
      %s160 = ssub.s32 %s30, %s37
      %s161 = sor.u32 %s159, %s160
      %p162 = scmp.eq.s32.totalorder %s161, 0
      %s164 = sadd.s32 %s163, 1
      %s165 = scalar_select %p162, %s163, %s164
      %p168 = pneg %p162
      %p169 = scmp.eq.s32.totalorder %s22, 3
      %p170 = por %p168, %p169
      %p171 = scmp.ne.s32.totalorder %s163, %s166
      %p172 = scmp.eq.s32.totalorder %s22, 0
      %p173 = por %p171, %p172
      %p174 = scmp.ne.s32.totalorder %s163, %s166
      %p175 = scmp.eq.s32.totalorder %s27, 3
      %p176 = por %p174, %p175
      %p177 = scmp.ne.s32.totalorder %s166, %s167
      %p178 = scmp.eq.s32.totalorder %s27, 0
      %p179 = por %p177, %p178
      %p180 = scmp.ne.s32.totalorder %s166, %s167
      %p181 = scmp.eq.s32.totalorder %s28, 3
      %p182 = por %p180, %p181
      %p184 = scmp.ne.s32.totalorder %s167, %s183
      %p185 = scmp.eq.s32.totalorder %s28, 0
      %p186 = por %p184, %p185
      %p187 = scmp.le.s32.totalorder 1, %s22
      %p188 = scmp.lt.s32.totalorder %s22, 5
      %p189 = pnand %p187, %p188
      %p190 = pneg %p189
      // Predicated region
      $region9: #{tpu_custom_call.1} parent=5 // pred_check
        _
      $region10: #{tpu_custom_call.1} parent=5 // pred_check_branch
        %192 = sbr.rel (%p189) target = $region12
      $region11: #{tpu_custom_call.1} parent=5 // pred_region
        %s193 = ssub.s32 %s22, 1
        // Predicated region
        $region13: #{tpu_custom_call.1} parent=11 // pred_check
          %p194 = pneg %p81
        $region14: #{tpu_custom_call.1} parent=11 // pred_check_branch
          %196 = sbr.rel (%p194) target = $region16
        $region15: #{tpu_custom_call.1} parent=11 // pred_region
          %198 = vsyncadd [#allocation9], 0
          %s199 = sshll.u32 %s1, 4
          %s200 = int_to_ptr.hbm [resolvable:$true] %s199
          %s201 = sshll.u32 [#allocation8], 4
          %s202 = int_to_ptr.vmem [resolvable:$true] %s201
          %207 = dma.hbm_to_vmem [thread:$0]  %s200, 512, %s202, [#allocation9], 128, 128, 8
        $region16: #{tpu_custom_call.1} parent=11 // pred_fallthru
          _
        // Predicated region
        $region17: #{tpu_custom_call.1} parent=11 // pred_check
          %p208 = pneg %p102
        $region18: #{tpu_custom_call.1} parent=11 // pred_check_branch
          %210 = sbr.rel (%p208) target = $region20
        $region19: #{tpu_custom_call.1} parent=11 // pred_region
          %212 = vsyncadd [#allocation9], 0
          %s213 = sshll.u32 %s2, 4
          %s214 = int_to_ptr.hbm [resolvable:$true] %s213
          %s215 = sshll.u32 [#allocation10], 4
          %s216 = int_to_ptr.vmem [resolvable:$true] %s215
          %221 = dma.hbm_to_vmem [thread:$0]  %s214, 512, %s216, [#allocation9], 128, 128, 8
        $region20: #{tpu_custom_call.1} parent=11 // pred_fallthru
          _
        // Predicated region
        $region21: #{tpu_custom_call.1} parent=11 // pred_check
          %p222 = pneg %p123
        $region22: #{tpu_custom_call.1} parent=11 // pred_check_branch
          %224 = sbr.rel (%p222) target = $region24
        $region23: #{tpu_custom_call.1} parent=11 // pred_region
          _
        $region24: #{tpu_custom_call.1} parent=11 // pred_fallthru
          _
      $region12: #{tpu_custom_call.1} parent=5 // pred_fallthru
        _
      %p225 = scmp.lt.s32.totalorder %s22, 4
      // Predicated region
      $region25: #{tpu_custom_call.1} parent=5 // pred_check
        %p226 = pneg %p225
      $region26: #{tpu_custom_call.1} parent=5 // pred_check_branch
        %228 = sbr.rel (%p226) target = $region28
      $region27: #{tpu_custom_call.1} parent=5 // pred_region
        // Predicated region
        $region29: #{tpu_custom_call.1} parent=27 // pred_check
          %p229 = pneg %p54
        $region30: #{tpu_custom_call.1} parent=27 // pred_check_branch
          %231 = sbr.rel (%p229) target = $region32
        $region31: #{tpu_custom_call.1} parent=27 // pred_region
          %s232 = sand.u32 %s44, 1
          %s233 = scalar_lea.sflag [#allocation6], %s232
          %s234 = sand.u32 %s44, 1
          %s235 = smul.addr %s234, 16
          %s236 = scalar_lea.vmem [#allocation5], %s235
          %238 = vsyncadd %s233, 0
          %s239 = smul.addr %s29, 2
          %s240 = smul.addr %s239, 8
          %s241 = scalar_lea.hbm %s0, %s240
          %s242 = sshll.u32 %s241, 4
          %s243 = int_to_ptr.hbm [resolvable:$true] %s242
          %s244 = sshll.u32 %s236, 4
          %s245 = int_to_ptr.vmem [resolvable:$true] %s244
          %250 = dma.hbm_to_vmem [thread:$0]  %s243, 256, %s245, %s233, 128, 128, 8
        $region32: #{tpu_custom_call.1} parent=27 // pred_fallthru
          _
      $region28: #{tpu_custom_call.1} parent=5 // pred_fallthru
        _
      %p251 = scmp.le.s32.totalorder 1, %s22
      %p252 = scmp.lt.s32.totalorder %s22, 5
      %p253 = pnand %p251, %p252
      %p254 = pneg %p253
      // Predicated region
      $region33: #{tpu_custom_call.1} parent=5 // pred_check
        _
      $region34: #{tpu_custom_call.1} parent=5 // pred_check_branch
        %256 = sbr.rel (%p253) target = $region36
      $region35: #{tpu_custom_call.1} parent=5 // pred_region
        %s257 = ssub.s32 %s22, 1
        %s258 = sand.u32 %s47, 1
        %s259 = scalar_lea.sflag [#allocation6], %s258
        %s260 = sand.u32 %s47, 1
        %s261 = smul.addr %s260, 16
        %s262 = scalar_lea.vmem [#allocation5], %s261
        // Predicated region
        $region37: #{tpu_custom_call.1} parent=35 // pred_check
          %p263 = pneg %p60
        $region38: #{tpu_custom_call.1} parent=35 // pred_check_branch
          %265 = sbr.rel (%p263) target = $region40
        $region39: #{tpu_custom_call.1} parent=35 // pred_region
          %267 = dma.done %s259, 256
        $region40: #{tpu_custom_call.1} parent=35 // pred_fallthru
          _
        // Predicated region
        $region41: #{tpu_custom_call.1} parent=35 // pred_check
          %p268 = pneg %p81
        $region42: #{tpu_custom_call.1} parent=35 // pred_check_branch
          %270 = sbr.rel (%p268) target = $region44
        $region43: #{tpu_custom_call.1} parent=35 // pred_region
          %272 = dma.done [#allocation9], 512
        $region44: #{tpu_custom_call.1} parent=35 // pred_fallthru
          _
        // Predicated region
        $region45: #{tpu_custom_call.1} parent=35 // pred_check
          %p273 = pneg %p102
        $region46: #{tpu_custom_call.1} parent=35 // pred_check_branch
          %275 = sbr.rel (%p273) target = $region48
        $region47: #{tpu_custom_call.1} parent=35 // pred_region
          %277 = dma.done [#allocation9], 512
        $region48: #{tpu_custom_call.1} parent=35 // pred_fallthru
          _
        %s278 = sand.u32 %s47, 1
        %s279 = scalar_lea.sflag [#allocation6], %s278
        %s280 = sand.u32 %s47, 1
        %s281 = smul.addr %s280, 16
        %s282 = scalar_lea.vmem [#allocation5], %s281
        %p283 = pneg %p60
        %p284 = pneg %p57
        %p285 = pneg %p81
        %p286 = pneg %p78
        %p287 = pneg %p102
        %p288 = pneg %p99
        %p289 = pneg %p123
        %p290 = pneg %p120
        %p291 = pneg %p151
        %p292 = pneg %p148
        %s293 = sand.u32 %s138, 1
        %s294 = scalar_lea.sflag [#allocation7], %s293
        %s295 = sand.u32 %s138, 1
        %s296 = smul.addr %s295, 8
        %s297 = scalar_lea.vmem [#allocation11], %s296
        %p298 = pneg %p179
        %p299 = pneg %p176
        %s300 = sand.u32 %s166, 1
        %s301 = scalar_lea.sflag [#allocation13], %s300
        %s302 = sand.u32 %s166, 1
        %s303 = smul.addr %s302, 32
        %s304 = scalar_lea.vmem [#allocation12], %s303
        %p305 = scmp.eq.s32.totalorder %s32, 0
        // Predicated region
        $region49: #{tpu_custom_call.1} parent=35 // pred_check
          %p306 = pneg %p305
        $region50: #{tpu_custom_call.1} parent=35 // pred_check_branch
          %308 = sbr.rel (%p306) target = $region52
        $region51: #{tpu_custom_call.1} parent=35 // pred_region
          %v309 = vld [vmem:[%s262] sm:$0xff]
          %v310 = vld [vmem:[%s262 + $0x8] sm:$0xff]
          %v311 = vld [vmem:[#allocation8] sm:$0xff]
          %v312 = vld [vmem:[#allocation8 + $0x8] sm:$0xff]
          %v313 = vld [vmem:[#allocation8 + $0x10] sm:$0xff]
          %v314 = vld [vmem:[#allocation8 + $0x18] sm:$0xff]
          %vm315 = vcmask 261120
          %v317 = vsel %vm315, %v309, 0
          %v320 = vsel %vm315, %v310, 0
          %322 = vmatpush.msra.mxu0 0.0
          %323 = vmatpush.msra.mxu0 0.0
          %324 = vmatpush.msra.mxu0 0.0
          %325 = vmatpush.msra.mxu0 0.0
          %326 = vmatpush.msra.mxu0 0.0
          %327 = vmatpush.msra.mxu0 0.0
          %328 = vmatpush.msra.mxu0 0.0
          %329 = vmatpush.msra.mxu0 0.0
          %330 = vmatpush.msra.mxu0 0.0
          %331 = vmatpush.msra.mxu0 0.0
          %332 = vmatpush.msra.mxu0 0.0
          %333 = vmatpush.msra.mxu0 0.0
          %334 = vmatpush.msra.mxu0 %v314
          %335 = vmatpush.msra.mxu0 %v313
          %336 = vmatpush.msra.mxu0 %v312
          %337 = vmatpush.msra.mxu0 %v311
          %338 = vmatmul.f32.gmra.mxu0 %v317
          %v339 = vpop.f32.mrf.mxu0
          %v340 = vadd.f32 0.0, %v339
          %341 = vmatmul.f32.gmra.mxu0 %v320
          %v342 = vpop.f32.mrf.mxu0
          %v343 = vadd.f32 0.0, %v342
          %344 = vdwg.mxu0
          %v345 = vmul.f32 %v340, 0.35355338
          %v346 = vmul.f32 %v343, 0.35355338
          %vm347 = vcmask 64512
          %348 = vst.msk [vmem:[#allocation2] sm:$0xff] %vm347, %v345
          %349 = vst.msk [vmem:[#allocation2 + $0x8] sm:$0xff] %vm347, %v346
          %352 = vrot.lane.b32.xlu0 %v340, 96
          %v353 = vpop.permute.xlu0 %352
          %354 = vrot.lane.b32.xlu0 %v343, 96
          %v355 = vpop.permute.xlu0 %354
          %358 = vst.msk [vmem:[#allocation3] sm:$0xff] %vm347, %v353
          %359 = vst.msk [vmem:[#allocation3 + $0x8] sm:$0xff] %vm347, %v355
          %360 = vrot.lane.b32.xlu0 %v340, 64
          %v361 = vpop.permute.xlu0 %360
          %362 = vrot.lane.b32.xlu0 %v343, 64
          %v363 = vpop.permute.xlu0 %362
          %366 = vst.msk [vmem:[#allocation4] sm:$0xff] %vm347, %v361
          %367 = vst.msk [vmem:[#allocation4 + $0x8] sm:$0xff] %vm347, %v363
          %370 = vrot.lane.b32.xlu0 %v345, 120
          %v371 = vpop.permute.xlu0 %370
          %372 = vrot.lane.b32.xlu0 %v346, 120
          %v373 = vpop.permute.xlu0 %372
          %s376 = scalar_lea.vmem [#allocation2], 16
          %377 = vst.msk [vmem:[%s376] sm:$0xff] %vm347, %v371
          %378 = vst.msk [vmem:[%s376 + $0x8] sm:$0xff] %vm347, %v373
          %379 = vrot.lane.b32.xlu0 %v340, 88
          %v380 = vpop.permute.xlu0 %379
          %381 = vrot.lane.b32.xlu0 %v343, 88
          %v382 = vpop.permute.xlu0 %381
          %s385 = scalar_lea.vmem [#allocation3], 16
          %386 = vst.msk [vmem:[%s385] sm:$0xff] %vm347, %v380
          %387 = vst.msk [vmem:[%s385 + $0x8] sm:$0xff] %vm347, %v382
          %388 = vrot.lane.b32.xlu0 %v340, 56
          %v389 = vpop.permute.xlu0 %388
          %390 = vrot.lane.b32.xlu0 %v343, 56
          %v391 = vpop.permute.xlu0 %390
          %s394 = scalar_lea.vmem [#allocation4], 16
          %395 = vst.msk [vmem:[%s394] sm:$0xff] %vm347, %v389
          %396 = vst.msk [vmem:[%s394 + $0x8] sm:$0xff] %vm347, %v391
          %397 = vrot.lane.b32.xlu0 %v345, 112
          %v398 = vpop.permute.xlu0 %397
          %399 = vrot.lane.b32.xlu0 %v346, 112
          %v400 = vpop.permute.xlu0 %399
          %s403 = scalar_lea.vmem [#allocation2], 32
          %404 = vst.msk [vmem:[%s403] sm:$0xff] %vm347, %v398
          %405 = vst.msk [vmem:[%s403 + $0x8] sm:$0xff] %vm347, %v400
          %406 = vrot.lane.b32.xlu0 %v340, 80
          %v407 = vpop.permute.xlu0 %406
          %408 = vrot.lane.b32.xlu0 %v343, 80
          %v409 = vpop.permute.xlu0 %408
          %s412 = scalar_lea.vmem [#allocation3], 32
          %413 = vst.msk [vmem:[%s412] sm:$0xff] %vm347, %v407
          %414 = vst.msk [vmem:[%s412 + $0x8] sm:$0xff] %vm347, %v409
          %415 = vrot.lane.b32.xlu0 %v340, 48
          %v416 = vpop.permute.xlu0 %415
          %417 = vrot.lane.b32.xlu0 %v343, 48
          %v418 = vpop.permute.xlu0 %417
          %s421 = scalar_lea.vmem [#allocation4], 32
          %422 = vst.msk [vmem:[%s421] sm:$0xff] %vm347, %v416
          %423 = vst.msk [vmem:[%s421 + $0x8] sm:$0xff] %vm347, %v418
          %424 = vrot.lane.b32.xlu0 %v345, 104
          %v425 = vpop.permute.xlu0 %424
          %426 = vrot.lane.b32.xlu0 %v346, 104
          %v427 = vpop.permute.xlu0 %426
          %s430 = scalar_lea.vmem [#allocation2], 48
          %431 = vst.msk [vmem:[%s430] sm:$0xff] %vm347, %v425
          %432 = vst.msk [vmem:[%s430 + $0x8] sm:$0xff] %vm347, %v427
          %433 = vrot.lane.b32.xlu0 %v340, 72
          %v434 = vpop.permute.xlu0 %433
          %435 = vrot.lane.b32.xlu0 %v343, 72
          %v436 = vpop.permute.xlu0 %435
          %s439 = scalar_lea.vmem [#allocation3], 48
          %440 = vst.msk [vmem:[%s439] sm:$0xff] %vm347, %v434
          %441 = vst.msk [vmem:[%s439 + $0x8] sm:$0xff] %vm347, %v436
          %442 = vrot.lane.b32.xlu0 %v340, 40
          %v443 = vpop.permute.xlu0 %442
          %444 = vrot.lane.b32.xlu0 %v343, 40
          %v445 = vpop.permute.xlu0 %444
          %s448 = scalar_lea.vmem [#allocation4], 48
          %449 = vst.msk [vmem:[%s448] sm:$0xff] %vm347, %v443
          %450 = vst.msk [vmem:[%s448 + $0x8] sm:$0xff] %vm347, %v445
        $region52: #{tpu_custom_call.1} parent=35 // pred_fallthru
          _
        %s451 = smul.u32 %s32, 8
        %s452 = scalar_lea.vmem [#allocation2], %s451
        %v453 = vld [vmem:[%s452] sm:$0xff]
        %v454 = vld [vmem:[%s452 + $0x10] sm:$0xff]
        %v455 = vld [vmem:[%s452 + $0x20] sm:$0xff]
        %v456 = vld [vmem:[%s452 + $0x30] sm:$0xff]
        %v457 = vld [vmem:[#allocation3] sm:$0xff]
        %v458 = vld [vmem:[#allocation3 + $0x8] sm:$0xff]
        %v459 = vld [vmem:[#allocation3 + $0x10] sm:$0xff]
        %v460 = vld [vmem:[#allocation3 + $0x18] sm:$0xff]
        %v461 = vld [vmem:[#allocation3 + $0x20] sm:$0xff]
        %v462 = vld [vmem:[#allocation3 + $0x28] sm:$0xff]
        %v463 = vld [vmem:[#allocation3 + $0x30] sm:$0xff]
        %v464 = vld [vmem:[#allocation3 + $0x38] sm:$0xff]
        %v465 = vld [vmem:[#allocation4] sm:$0xff]
        %v466 = vld [vmem:[#allocation4 + $0x8] sm:$0xff]
        %v467 = vld [vmem:[#allocation4 + $0x10] sm:$0xff]
        %v468 = vld [vmem:[#allocation4 + $0x18] sm:$0xff]
        %v469 = vld [vmem:[#allocation4 + $0x20] sm:$0xff]
        %v470 = vld [vmem:[#allocation4 + $0x28] sm:$0xff]
        %v471 = vld [vmem:[#allocation4 + $0x30] sm:$0xff]
        %v472 = vld [vmem:[#allocation4 + $0x38] sm:$0xff]
        %vm473 = vcmask 64512
        %v475 = vsel %vm473, %v453, 0
        %v478 = vsel %vm473, %v457, 0
        %v481 = vsel %vm473, %v458, 0
        %483 = vmatpush.xpose.msra.mxu0 0.0
        %484 = vmatpush.xpose.msra.mxu0 0.0
        %485 = vmatpush.xpose.msra.mxu0 0.0
        %486 = vmatpush.xpose.msra.mxu0 0.0
        %487 = vmatpush.xpose.msra.mxu0 0.0
        %488 = vmatpush.xpose.msra.mxu0 0.0
        %489 = vmatpush.xpose.msra.mxu0 0.0
        %490 = vmatpush.xpose.msra.mxu0 0.0
        %491 = vmatpush.xpose.msra.mxu0 0.0
        %492 = vmatpush.xpose.msra.mxu0 0.0
        %493 = vmatpush.xpose.msra.mxu0 0.0
        %494 = vmatpush.xpose.msra.mxu0 0.0
        %495 = vmatpush.xpose.msra.mxu0 0.0
        %496 = vmatpush.xpose.msra.mxu0 0.0
        %497 = vmatpush.xpose.msra.mxu0 %v481
        %498 = vmatpush.xpose.msra.mxu0 %v478
        %499 = vmatmul.f32.gmra.mxu0 %v475
        %v500 = vpop.f32.mrf.mxu0
        %v501 = vadd.f32 0.0, %v500
        %502 = vdwg.mxu0
        %v504 = vsel %vm473, %v454, 0
        %v507 = vsel %vm473, %v459, 0
        %v510 = vsel %vm473, %v460, 0
        %512 = vmatpush.xpose.msra.mxu0 0.0
        %513 = vmatpush.xpose.msra.mxu0 0.0
        %514 = vmatpush.xpose.msra.mxu0 0.0
        %515 = vmatpush.xpose.msra.mxu0 0.0
        %516 = vmatpush.xpose.msra.mxu0 0.0
        %517 = vmatpush.xpose.msra.mxu0 0.0
        %518 = vmatpush.xpose.msra.mxu0 0.0
        %519 = vmatpush.xpose.msra.mxu0 0.0
        %520 = vmatpush.xpose.msra.mxu0 0.0
        %521 = vmatpush.xpose.msra.mxu0 0.0
        %522 = vmatpush.xpose.msra.mxu0 0.0
        %523 = vmatpush.xpose.msra.mxu0 0.0
        %524 = vmatpush.xpose.msra.mxu0 0.0
        %525 = vmatpush.xpose.msra.mxu0 0.0
        %526 = vmatpush.xpose.msra.mxu0 %v510
        %527 = vmatpush.xpose.msra.mxu0 %v507
        %528 = vmatmul.f32.gmra.mxu0 %v504
        %v529 = vpop.f32.mrf.mxu0
        %v530 = vadd.f32 0.0, %v529
        %531 = vdwg.mxu0
        %v533 = vsel %vm473, %v455, 0
        %v536 = vsel %vm473, %v461, 0
        %v539 = vsel %vm473, %v462, 0
        %541 = vmatpush.xpose.msra.mxu0 0.0
        %542 = vmatpush.xpose.msra.mxu0 0.0
        %543 = vmatpush.xpose.msra.mxu0 0.0
        %544 = vmatpush.xpose.msra.mxu0 0.0
        %545 = vmatpush.xpose.msra.mxu0 0.0
        %546 = vmatpush.xpose.msra.mxu0 0.0
        %547 = vmatpush.xpose.msra.mxu0 0.0
        %548 = vmatpush.xpose.msra.mxu0 0.0
        %549 = vmatpush.xpose.msra.mxu0 0.0
        %550 = vmatpush.xpose.msra.mxu0 0.0
        %551 = vmatpush.xpose.msra.mxu0 0.0
        %552 = vmatpush.xpose.msra.mxu0 0.0
        %553 = vmatpush.xpose.msra.mxu0 0.0
        %554 = vmatpush.xpose.msra.mxu0 0.0
        %555 = vmatpush.xpose.msra.mxu0 %v539
        %556 = vmatpush.xpose.msra.mxu0 %v536
        %557 = vmatmul.f32.gmra.mxu0 %v533
        %v558 = vpop.f32.mrf.mxu0
        %v559 = vadd.f32 0.0, %v558
        %560 = vdwg.mxu0
        %v562 = vsel %vm473, %v456, 0
        %v565 = vsel %vm473, %v463, 0
        %v568 = vsel %vm473, %v464, 0
        %570 = vmatpush.xpose.msra.mxu0 0.0
        %571 = vmatpush.xpose.msra.mxu0 0.0
        %572 = vmatpush.xpose.msra.mxu0 0.0
        %573 = vmatpush.xpose.msra.mxu0 0.0
        %574 = vmatpush.xpose.msra.mxu0 0.0
        %575 = vmatpush.xpose.msra.mxu0 0.0
        %576 = vmatpush.xpose.msra.mxu0 0.0
        %577 = vmatpush.xpose.msra.mxu0 0.0
        %578 = vmatpush.xpose.msra.mxu0 0.0
        %579 = vmatpush.xpose.msra.mxu0 0.0
        %580 = vmatpush.xpose.msra.mxu0 0.0
        %581 = vmatpush.xpose.msra.mxu0 0.0
        %582 = vmatpush.xpose.msra.mxu0 0.0
        %583 = vmatpush.xpose.msra.mxu0 0.0
        %584 = vmatpush.xpose.msra.mxu0 %v568
        %585 = vmatpush.xpose.msra.mxu0 %v565
        %586 = vmatmul.f32.gmra.mxu0 %v562
        %v587 = vpop.f32.mrf.mxu0
        %v588 = vadd.f32 0.0, %v587
        %589 = vdwg.mxu0
        %vm590 = vcmask 130048
        %v591 = vsel %vm590, %v501, -inf
        %592 = vmax.xlane.f32.xlu0 %v591
        %v593 = vpop.xlane.xlu0 %592
        %v594 = vsel %vm590, %v530, -inf
        %595 = vmax.xlane.f32.xlu0 %v594
        %v596 = vpop.xlane.xlu0 %595
        %v597 = vsel %vm590, %v559, -inf
        %598 = vmax.xlane.f32.xlu0 %v597
        %v599 = vpop.xlane.xlu0 %598
        %v600 = vsel %vm590, %v588, -inf
        %601 = vmax.xlane.f32.xlu0 %v600
        %v602 = vpop.xlane.xlu0 %601
        %v603 = vsub.f32 %v501, %v593
        %v604 = vsub.f32 %v530, %v596
        %v605 = vsub.f32 %v559, %v599
        %v606 = vsub.f32 %v588, %v602
        %v607 = vmul.f32 %v603, 1.442695
        %v608 = vpow.pop %v607
        %v609 = vmul.f32 %v604, 1.442695
        %v610 = vpow.pop %v609
        %v611 = vmul.f32 %v605, 1.442695
        %v612 = vpow.pop %v611
        %v613 = vmul.f32 %v606, 1.442695
        %v614 = vpow.pop %v613
        %v615 = vsel %vm590, %v608, 0.0
        %616 = vadd.xlane.f32.xlu0 %v615
        %v617 = vpop.xlane.xlu0 %616
        %v618 = vsel %vm590, %v610, 0.0
        %619 = vadd.xlane.f32.xlu0 %v618
        %v620 = vpop.xlane.xlu0 %619
        %v621 = vsel %vm590, %v612, 0.0
        %622 = vadd.xlane.f32.xlu0 %v621
        %v623 = vpop.xlane.xlu0 %622
        %v624 = vsel %vm590, %v614, 0.0
        %625 = vadd.xlane.f32.xlu0 %v624
        %v626 = vpop.xlane.xlu0 %625
        %v627 = vrcp.pop %v617
        %v628 = vmul.f32 %v617, %v627
        %v629 = vsub.f32 1.0, %v628
        %v630 = vmul.f32 %v627, %v629
        %v631 = vadd.f32 %v627, %v630
        %vm632 = vweird.f32 %v617
        %vm633 = vweird.f32 %v627
        %vm634 = vmor %vm632, %vm633
        %v635 = vsel %vm634, %v627, %v631
        %v636 = vand.u32 2147483647, %v617
        %vm637 = vcmp.eq.f32.partialorder %v636, 8.507059e+37
        %v638 = vand.u32 %v617, 2147483648
        %v639 = vor.u32 1.1754944e-38, %v638
        %v640 = vsel %vm637, %v639, %v635
        %v641 = vrcp.pop %v620
        %v642 = vmul.f32 %v620, %v641
        %v643 = vsub.f32 1.0, %v642
        %v644 = vmul.f32 %v641, %v643
        %v645 = vadd.f32 %v641, %v644
        %vm646 = vweird.f32 %v620
        %vm647 = vweird.f32 %v641
        %vm648 = vmor %vm646, %vm647
        %v649 = vsel %vm648, %v641, %v645
        %v650 = vand.u32 2147483647, %v620
        %vm651 = vcmp.eq.f32.partialorder %v650, 8.507059e+37
        %v652 = vand.u32 %v620, 2147483648
        %v653 = vor.u32 1.1754944e-38, %v652
        %v654 = vsel %vm651, %v653, %v649
        %v655 = vrcp.pop %v623
        %v656 = vmul.f32 %v623, %v655
        %v657 = vsub.f32 1.0, %v656
        %v658 = vmul.f32 %v655, %v657
        %v659 = vadd.f32 %v655, %v658
        %vm660 = vweird.f32 %v623
        %vm661 = vweird.f32 %v655
        %vm662 = vmor %vm660, %vm661
        %v663 = vsel %vm662, %v655, %v659
        %v664 = vand.u32 2147483647, %v623
        %vm665 = vcmp.eq.f32.partialorder %v664, 8.507059e+37
        %v666 = vand.u32 %v623, 2147483648
        %v667 = vor.u32 1.1754944e-38, %v666
        %v668 = vsel %vm665, %v667, %v663
        %v669 = vrcp.pop %v626
        %v670 = vmul.f32 %v626, %v669
        %v671 = vsub.f32 1.0, %v670
        %v672 = vmul.f32 %v669, %v671
        %v673 = vadd.f32 %v669, %v672
        %vm674 = vweird.f32 %v626
        %vm675 = vweird.f32 %v669
        %vm676 = vmor %vm674, %vm675
        %v677 = vsel %vm676, %v669, %v673
        %v678 = vand.u32 2147483647, %v626
        %vm679 = vcmp.eq.f32.partialorder %v678, 8.507059e+37
        %v680 = vand.u32 %v626, 2147483648
        %v681 = vor.u32 1.1754944e-38, %v680
        %v682 = vsel %vm679, %v681, %v677
        %v683 = vmul.f32 %v608, %v640
        %v684 = vmul.f32 %v610, %v654
        %v685 = vmul.f32 %v612, %v668
        %v686 = vmul.f32 %v614, %v682
        %687 = vst.msk [vmem:[%s304] sm:$0xff] %vm590, %v683
        %688 = vst.msk [vmem:[%s304 + $0x8] sm:$0xff] %vm590, %v684
        %689 = vst.msk [vmem:[%s304 + $0x10] sm:$0xff] %vm590, %v685
        %690 = vst.msk [vmem:[%s304 + $0x18] sm:$0xff] %vm590, %v686
        %v692 = vsel %vm590, %v683, 0
        %694 = vmatpush.msra.mxu0 0.0
        %695 = vmatpush.msra.mxu0 0.0
        %696 = vmatpush.msra.mxu0 0.0
        %697 = vmatpush.msra.mxu0 0.0
        %698 = vmatpush.msra.mxu0 0.0
        %699 = vmatpush.msra.mxu0 0.0
        %700 = vmatpush.msra.mxu0 0.0
        %701 = vmatpush.msra.mxu0 0.0
        %702 = vmatpush.msra.mxu0 0.0
        %703 = vmatpush.msra.mxu0 0.0
        %704 = vmatpush.msra.mxu0 0.0
        %705 = vmatpush.msra.mxu0 0.0
        %706 = vmatpush.msra.mxu0 0.0
        %707 = vmatpush.msra.mxu0 0.0
        %708 = vmatpush.msra.mxu0 %v466
        %709 = vmatpush.msra.mxu0 %v465
        %710 = vmatmul.f32.gmra.mxu0 %v692
        %v711 = vpop.f32.mrf.mxu0
        %v712 = vadd.f32 0.0, %v711
        %713 = vdwg.mxu0
        %v715 = vsel %vm590, %v684, 0
        %717 = vmatpush.msra.mxu0 0.0
        %718 = vmatpush.msra.mxu0 0.0
        %719 = vmatpush.msra.mxu0 0.0
        %720 = vmatpush.msra.mxu0 0.0
        %721 = vmatpush.msra.mxu0 0.0
        %722 = vmatpush.msra.mxu0 0.0
        %723 = vmatpush.msra.mxu0 0.0
        %724 = vmatpush.msra.mxu0 0.0
        %725 = vmatpush.msra.mxu0 0.0
        %726 = vmatpush.msra.mxu0 0.0
        %727 = vmatpush.msra.mxu0 0.0
        %728 = vmatpush.msra.mxu0 0.0
        %729 = vmatpush.msra.mxu0 0.0
        %730 = vmatpush.msra.mxu0 0.0
        %731 = vmatpush.msra.mxu0 %v468
        %732 = vmatpush.msra.mxu0 %v467
        %733 = vmatmul.f32.gmra.mxu0 %v715
        %v734 = vpop.f32.mrf.mxu0
        %v735 = vadd.f32 0.0, %v734
        %736 = vdwg.mxu0
        %v738 = vsel %vm590, %v685, 0
        %740 = vmatpush.msra.mxu0 0.0
        %741 = vmatpush.msra.mxu0 0.0
        %742 = vmatpush.msra.mxu0 0.0
        %743 = vmatpush.msra.mxu0 0.0
        %744 = vmatpush.msra.mxu0 0.0
        %745 = vmatpush.msra.mxu0 0.0
        %746 = vmatpush.msra.mxu0 0.0
        %747 = vmatpush.msra.mxu0 0.0
        %748 = vmatpush.msra.mxu0 0.0
        %749 = vmatpush.msra.mxu0 0.0
        %750 = vmatpush.msra.mxu0 0.0
        %751 = vmatpush.msra.mxu0 0.0
        %752 = vmatpush.msra.mxu0 0.0
        %753 = vmatpush.msra.mxu0 0.0
        %754 = vmatpush.msra.mxu0 %v470
        %755 = vmatpush.msra.mxu0 %v469
        %756 = vmatmul.f32.gmra.mxu0 %v738
        %v757 = vpop.f32.mrf.mxu0
        %v758 = vadd.f32 0.0, %v757
        %759 = vdwg.mxu0
        %v761 = vsel %vm590, %v686, 0
        %763 = vmatpush.msra.mxu0 0.0
        %764 = vmatpush.msra.mxu0 0.0
        %765 = vmatpush.msra.mxu0 0.0
        %766 = vmatpush.msra.mxu0 0.0
        %767 = vmatpush.msra.mxu0 0.0
        %768 = vmatpush.msra.mxu0 0.0
        %769 = vmatpush.msra.mxu0 0.0
        %770 = vmatpush.msra.mxu0 0.0
        %771 = vmatpush.msra.mxu0 0.0
        %772 = vmatpush.msra.mxu0 0.0
        %773 = vmatpush.msra.mxu0 0.0
        %774 = vmatpush.msra.mxu0 0.0
        %775 = vmatpush.msra.mxu0 0.0
        %776 = vmatpush.msra.mxu0 0.0
        %777 = vmatpush.msra.mxu0 %v472
        %778 = vmatpush.msra.mxu0 %v471
        %779 = vmatmul.f32.gmra.mxu0 %v761
        %v780 = vpop.f32.mrf.mxu0
        %v781 = vadd.f32 0.0, %v780
        %782 = vdwg.mxu0
        %784 = vrot.lane.b32.xlu0 %v735, 8
        %v785 = vpop.permute.xlu0 %784
        %788 = vrot.lane.b32.xlu0 %v758, 16
        %v789 = vpop.permute.xlu0 %788
        %792 = vrot.lane.b32.xlu0 %v781, 24
        %v793 = vpop.permute.xlu0 %792
        %v795 = vsel %vm473, %v712, %v785
        %v796 = vsel %vm590, %v795, %v789
        %vm797 = vcmask 195584
        %v798 = vsel %vm797, %v796, %v793
        %v799 = vld [vmem:[#allocation10] sm:$0xff]
        %v800 = vld [vmem:[#allocation10 + $0x8] sm:$0xff]
        %v801 = vld [vmem:[#allocation10 + $0x10] sm:$0xff]
        %v802 = vld [vmem:[#allocation10 + $0x18] sm:$0xff]
        %v803 = vld [vmem:[%s3] sm:$0x1]
        %v805 = vperm.slane %v803, 0
        %vm807 = vcmask 261120
        %v809 = vsel %vm807, %v798, 0
        %811 = vmatpush.msra.mxu0 0.0
        %812 = vmatpush.msra.mxu0 0.0
        %813 = vmatpush.msra.mxu0 0.0
        %814 = vmatpush.msra.mxu0 0.0
        %815 = vmatpush.msra.mxu0 0.0
        %816 = vmatpush.msra.mxu0 0.0
        %817 = vmatpush.msra.mxu0 0.0
        %818 = vmatpush.msra.mxu0 0.0
        %819 = vmatpush.msra.mxu0 0.0
        %820 = vmatpush.msra.mxu0 0.0
        %821 = vmatpush.msra.mxu0 0.0
        %822 = vmatpush.msra.mxu0 0.0
        %823 = vmatpush.msra.mxu0 %v802
        %824 = vmatpush.msra.mxu0 %v801
        %825 = vmatpush.msra.mxu0 %v800
        %826 = vmatpush.msra.mxu0 %v799
        %827 = vmatmul.f32.gmra.mxu0 %v809
        %v828 = vpop.f32.mrf.mxu0
        %v829 = vadd.f32 %v805, %v828
        %830 = vdwg.mxu0
        %831 = vst.msk [vmem:[%s297] sm:$0xff] %vm807, %v829
        %s832 = sand.u32 %s138, 1
        %s833 = scalar_lea.sflag [#allocation7], %s832
        %s834 = sand.u32 %s138, 1
        %s835 = smul.addr %s834, 8
        %s836 = scalar_lea.vmem [#allocation11], %s835
        %s837 = sand.u32 %s166, 1
        %s838 = scalar_lea.sflag [#allocation13], %s837
        %s839 = sand.u32 %s166, 1
        %s840 = smul.addr %s839, 32
        %s841 = scalar_lea.vmem [#allocation12], %s840
        // Predicated region
        $region53: #{tpu_custom_call.1} parent=35 // pred_check
          %p842 = pneg %p148
        $region54: #{tpu_custom_call.1} parent=35 // pred_check_branch
          %844 = sbr.rel (%p842) target = $region56
        $region55: #{tpu_custom_call.1} parent=35 // pred_region
          %846 = vsyncadd %s833, 0
          %s847 = smul.addr %s31, 2
          %s848 = sadd.s32 %s32, %s847
          %s849 = smul.addr %s848, 8
          %s850 = scalar_lea.hbm %s4, %s849
          %s852 = sshll.u32 %s836, 4
          %s853 = int_to_ptr.vmem [resolvable:$true] %s852
          %s854 = sshll.u32 %s850, 4
          %s855 = int_to_ptr.hbm [resolvable:$true] %s854
          %857 = dma.vmem_to_hbm [thread:$0]  %s853, 128, %s855, %s833
        $region56: #{tpu_custom_call.1} parent=35 // pred_fallthru
          _
        // Predicated region
        $region57: #{tpu_custom_call.1} parent=35 // pred_check
          %p858 = pneg %p176
        $region58: #{tpu_custom_call.1} parent=35 // pred_check_branch
          %860 = sbr.rel (%p858) target = $region60
        $region59: #{tpu_custom_call.1} parent=35 // pred_region
          %862 = vsyncadd %s838, 0
          %s863 = smul.addr %s31, 8
          %s864 = sadd.s32 %s32, %s863
          %s865 = smul.addr %s864, 8
          %s866 = scalar_lea.hbm %s5, %s865
          %s867 = sshll.u32 %s841, 4
          %s868 = int_to_ptr.vmem [resolvable:$true] %s867
          %s869 = sshll.u32 %s866, 4
          %s870 = int_to_ptr.hbm [resolvable:$true] %s869
          %875 = dma.vmem_to_hbm [thread:$0]  %s868, 512, %s870, %s838, 128, 256, 8
        $region60: #{tpu_custom_call.1} parent=35 // pred_fallthru
          _
      $region36: #{tpu_custom_call.1} parent=5 // pred_fallthru
        _
      %p876 = scmp.le.s32.totalorder 2, %s22
      // Predicated region
      $region61: #{tpu_custom_call.1} parent=5 // pred_check
        %p877 = pneg %p876
      $region62: #{tpu_custom_call.1} parent=5 // pred_check_branch
        %879 = sbr.rel (%p877) target = $region64
      $region63: #{tpu_custom_call.1} parent=5 // pred_region
        %s880 = ssub.s32 %s22, 2
        // Predicated region
        $region65: #{tpu_custom_call.1} parent=63 // pred_check
          %p881 = pneg %p154
        $region66: #{tpu_custom_call.1} parent=63 // pred_check_branch
          %883 = sbr.rel (%p881) target = $region68
        $region67: #{tpu_custom_call.1} parent=63 // pred_region
          %s884 = sand.u32 %s139, 1
          %s885 = scalar_lea.sflag [#allocation7], %s884
          %s886 = sand.u32 %s139, 1
          %s887 = smul.addr %s886, 8
          %s888 = scalar_lea.vmem [#allocation11], %s887
          %890 = dma.done %s885, 128
        $region68: #{tpu_custom_call.1} parent=63 // pred_fallthru
          _
        // Predicated region
        $region69: #{tpu_custom_call.1} parent=63 // pred_check
          %p891 = pneg %p182
        $region70: #{tpu_custom_call.1} parent=63 // pred_check_branch
          %893 = sbr.rel (%p891) target = $region72
        $region71: #{tpu_custom_call.1} parent=63 // pred_region
          %s894 = sand.u32 %s167, 1
          %s895 = scalar_lea.sflag [#allocation13], %s894
          %s896 = sand.u32 %s167, 1
          %s897 = smul.addr %s896, 32
          %s898 = scalar_lea.vmem [#allocation12], %s897
          %900 = dma.done %s895, 512
        $region72: #{tpu_custom_call.1} parent=63 // pred_fallthru
          _
      $region64: #{tpu_custom_call.1} parent=5 // pred_fallthru
        _
    $region6: #{tpu_custom_call.1} parent=1 // loop_footer
      %s26 = sadd.s32 1, %s22
    $region7: #{tpu_custom_call.1} parent=1 // loop_footer_branch
      %21 = sbr.rel target = $region3
    $region8: #{tpu_custom_call.1} parent=1 // loop_exit
      _
    %901 = vsyncpa [#allocation6], 1
    %s902 = scalar_lea.sflag [#allocation6], 1
    %903 = vsyncpa %s902, 1
    %904 = vsyncpa [#allocation9], 1
    %905 = vsyncpa [#allocation7], 1
    %s906 = scalar_lea.sflag [#allocation7], 1
    %907 = vsyncpa %s906, 1
    %908 = vsyncpa [#allocation13], 1
    %s909 = scalar_lea.sflag [#allocation13], 1
    %910 = vsyncpa %s909, 1

// kernel: tpu_custom_call.1
$region0: #{tpu_custom_call.1}
  #allocation0 [shape = 'u32[]', space=smem, size = 0x4, offset = 0x4, fixed_abs, tag = 'smem constant byte address 0x4 - core index']
  #allocation1 [shape = 'u32[72,128]{1,0:T(1,128)}', space=vmem, size = 0x9000, scoped, tag = 'internal scratch']
  #allocation2 [shape = 'f32[4,16,8]{2,1,0:T(8,128)}', space=vmem, size = 0x8000, scoped, tag = 'scratch operand']
  #allocation3 [shape = 'f32[4,16,8]{2,1,0:T(8,128)}', space=vmem, size = 0x8000, scoped, tag = 'scratch operand']
  #allocation4 [shape = 'f32[4,16,8]{2,1,0:T(8,128)}', space=vmem, size = 0x8000, scoped, tag = 'scratch operand']
  #allocation5 [shape = 'f32[8,32]{1,0:T(8,128)}', space=vmem, size = 0x1000, scoped, tag = 'scratch operand']
  %s0 = inlined_call_operand.hbm [shape: f32[2,16,32], index: 0, kind: input, shape index: {}]
  %s1 = inlined_call_operand.hbm [shape: f32[32,96], index: 1, kind: input, shape index: {}]
  %s2 = inlined_call_operand.hbm [shape: f32[32,32], index: 2, kind: input, shape index: {}]
  %s3 = inlined_call_operand.vmem [shape: f32[1,32], index: 3, kind: input, shape index: {}]
  %s4 = inlined_call_operand.hbm [shape: f32[2,16,32], index: 4, kind: output, shape index: {0}]
  %s5 = inlined_call_operand.hbm [shape: f32[2,4,16,16], index: 5, kind: output, shape index: {1}]
  %6 = xla_tuple %s4, %s5
  %s7 = sld [smem:[#allocation0]]
  $region73: #{tpu_custom_call.1} parent=0
    _
  %s9 = ssub.s32 1, %s7
  %s10 = scalar_select 0, %s9, %s7
  $region1: #{tpu_custom_call.1} parent=0
    #allocation6 [shape = 'u8[16384]{0}', space=vmem, size = 0x4000, scoped, tag = 'input window, operand 0']
    #allocation7 [shape = 's32[2]{0}', space=sflag, size = 0x8, scoped, tag = 'scoped memory for tpu_custom_call.1']
    #allocation8 [shape = 's32[2]{0}', space=sflag, size = 0x8, scoped, tag = 'scoped memory for tpu_custom_call.1']
    #allocation9 [shape = 'u8[16384]{0}', space=vmem, size = 0x4000, scoped, tag = 'input window, operand 1, single buffered']
    #allocation10 [shape = 's32[1]{0}', space=sflag, size = 0x4, scoped, tag = 'scoped memory for tpu_custom_call.1']
    #allocation11 [shape = 'u8[16384]{0}', space=vmem, size = 0x4000, scoped, tag = 'input window, operand 2, single buffered']
    #allocation12 [shape = 'u8[8192]{0}', space=vmem, size = 0x2000, scoped, tag = 'output window, operand 0']
    #allocation13 [shape = 'u8[32768]{0}', space=vmem, size = 0x8000, scoped, tag = 'output window, operand 1']
    #allocation14 [shape = 's32[2]{0}', space=sflag, size = 0x8, scoped, tag = 'scoped memory for tpu_custom_call.1']
    %11 = vsyncpa [#allocation7], 0
    %s12 = scalar_lea.sflag [#allocation7], 1
    %13 = vsyncpa %s12, 0
    %14 = vsyncpa [#allocation10], 0
    %15 = vsyncpa [#allocation8], 0
    %s16 = scalar_lea.sflag [#allocation8], 1
    %17 = vsyncpa %s16, 0
    %18 = vsyncpa [#allocation14], 0
    %s19 = scalar_lea.sflag [#allocation14], 1
    %20 = vsyncpa %s19, 0
    loop: start=0, step=1, limit=6
    $region2: #{tpu_custom_call.1} parent=1 // loop_pre_header
      _
    $region3: #{tpu_custom_call.1} parent=1 // loop_header
      %s22 = sphi 0, %s26
      %p23 = scmp.ge.s32.totalorder %s22, 6
      %s29 = sphi 0, %s41
      %s30 = sphi 0, %s37
      %s31 = sphi 0, %s29
      %s32 = sphi 0, %s30
      %s33 = sphi 0, %s31
      %s34 = sphi 0, %s32
      %s44 = sphi 0, %s46
      %s47 = sphi 0, %s44
      %s48 = sphi 0, %s47
      %s64 = sphi 0, %s48
      %s68 = sphi 0, %s68
      %s70 = sphi 0, %s68
      %s71 = sphi 0, %s70
      %s85 = sphi 0, %s71
      %s89 = sphi 0, %s89
      %s91 = sphi 0, %s89
      %s92 = sphi 0, %s91
      %s106 = sphi 0, %s92
      %s110 = sphi 0, %s110
      %s112 = sphi 0, %s110
      %s113 = sphi 0, %s112
      %s127 = sphi 0, %s113
      %s135 = sphi 0, %s137
      %s138 = sphi 0, %s135
      %s139 = sphi 0, %s138
      %s155 = sphi 0, %s139
      %s163 = sphi 0, %s165
      %s166 = sphi 0, %s163
      %s167 = sphi 0, %s166
      %s183 = sphi 0, %s167
    $region4: #{tpu_custom_call.1} parent=1 // loop_header_branch
      %25 = sbr.rel (%p23) target = $region8
    $region5: #{tpu_custom_call.1} parent=1 // loop_body
      %s27 = ssub.s32 %s22, 1
      %s28 = ssub.s32 %s22, 2
      %s35 = sadd.s32 1, %s30
      %p36 = scmp.ge.s32.totalorder %s35, 2
      %s37 = scalar_select %p36, 0, %s35
      %s38 = sadd.s32 1, %s29
      %s39 = scalar_select %p36, %s38, %s29
      %p40 = scmp.ge.s32.totalorder %s39, 2
      %s41 = scalar_select %p40, 0, %s39
      %s42 = ssub.s32 %s29, %s41
      %p43 = scmp.eq.s32.totalorder %s42, 0
      %s45 = sadd.s32 %s44, 1
      %s46 = scalar_select %p43, %s44, %s45
      %p49 = pneg %p43
      %p50 = scmp.eq.s32.totalorder %s22, 3
      %p51 = por %p49, %p50
      %p52 = scmp.ne.s32.totalorder %s44, %s47
      %p53 = scmp.eq.s32.totalorder %s22, 0
      %p54 = por %p52, %p53
      %p55 = scmp.ne.s32.totalorder %s44, %s47
      %p56 = scmp.eq.s32.totalorder %s27, 3
      %p57 = por %p55, %p56
      %p58 = scmp.ne.s32.totalorder %s47, %s48
      %p59 = scmp.eq.s32.totalorder %s27, 0
      %p60 = por %p58, %p59
      %p61 = scmp.ne.s32.totalorder %s47, %s48
      %p62 = scmp.eq.s32.totalorder %s28, 3
      %p63 = por %p61, %p62
      %p65 = scmp.ne.s32.totalorder %s48, %s64
      %p66 = scmp.eq.s32.totalorder %s28, 0
      %p67 = por %p65, %p66
      %s69 = sadd.s32 %s68, 1
      %p72 = scmp.eq.s32.totalorder %s22, 3
      %p73 = scmp.ne.s32.totalorder %s68, %s70
      %p74 = scmp.eq.s32.totalorder %s22, 0
      %p75 = por %p73, %p74
      %p76 = scmp.ne.s32.totalorder %s68, %s70
      %p77 = scmp.eq.s32.totalorder %s27, 3
      %p78 = por %p76, %p77
      %p79 = scmp.ne.s32.totalorder %s70, %s71
      %p80 = scmp.eq.s32.totalorder %s27, 0
      %p81 = por %p79, %p80
      %p82 = scmp.ne.s32.totalorder %s70, %s71
      %p83 = scmp.eq.s32.totalorder %s28, 3
      %p84 = por %p82, %p83
      %p86 = scmp.ne.s32.totalorder %s71, %s85
      %p87 = scmp.eq.s32.totalorder %s28, 0
      %p88 = por %p86, %p87
      %s90 = sadd.s32 %s89, 1
      %p93 = scmp.eq.s32.totalorder %s22, 3
      %p94 = scmp.ne.s32.totalorder %s89, %s91
      %p95 = scmp.eq.s32.totalorder %s22, 0
      %p96 = por %p94, %p95
      %p97 = scmp.ne.s32.totalorder %s89, %s91
      %p98 = scmp.eq.s32.totalorder %s27, 3
      %p99 = por %p97, %p98
      %p100 = scmp.ne.s32.totalorder %s91, %s92
      %p101 = scmp.eq.s32.totalorder %s27, 0
      %p102 = por %p100, %p101
      %p103 = scmp.ne.s32.totalorder %s91, %s92
      %p104 = scmp.eq.s32.totalorder %s28, 3
      %p105 = por %p103, %p104
      %p107 = scmp.ne.s32.totalorder %s92, %s106
      %p108 = scmp.eq.s32.totalorder %s28, 0
      %p109 = por %p107, %p108
      %s111 = sadd.s32 %s110, 1
      %p114 = scmp.eq.s32.totalorder %s22, 3
      %p115 = scmp.ne.s32.totalorder %s110, %s112
      %p116 = scmp.eq.s32.totalorder %s22, 0
      %p117 = por %p115, %p116
      %p118 = scmp.ne.s32.totalorder %s110, %s112
      %p119 = scmp.eq.s32.totalorder %s27, 3
      %p120 = por %p118, %p119
      %p121 = scmp.ne.s32.totalorder %s112, %s113
      %p122 = scmp.eq.s32.totalorder %s27, 0
      %p123 = por %p121, %p122
      %p124 = scmp.ne.s32.totalorder %s112, %s113
      %p125 = scmp.eq.s32.totalorder %s28, 3
      %p126 = por %p124, %p125
      %p128 = scmp.ne.s32.totalorder %s113, %s127
      %p129 = scmp.eq.s32.totalorder %s28, 0
      %p130 = por %p128, %p129
      %s131 = ssub.s32 %s29, %s41
      %s132 = ssub.s32 %s30, %s37
      %s133 = sor.u32 %s131, %s132
      %p134 = scmp.eq.s32.totalorder %s133, 0
      %s136 = sadd.s32 %s135, 1
      %s137 = scalar_select %p134, %s135, %s136
      %p140 = pneg %p134
      %p141 = scmp.eq.s32.totalorder %s22, 3
      %p142 = por %p140, %p141
      %p143 = scmp.ne.s32.totalorder %s135, %s138
      %p144 = scmp.eq.s32.totalorder %s22, 0
      %p145 = por %p143, %p144
      %p146 = scmp.ne.s32.totalorder %s135, %s138
      %p147 = scmp.eq.s32.totalorder %s27, 3
      %p148 = por %p146, %p147
      %p149 = scmp.ne.s32.totalorder %s138, %s139
      %p150 = scmp.eq.s32.totalorder %s27, 0
      %p151 = por %p149, %p150
      %p152 = scmp.ne.s32.totalorder %s138, %s139
      %p153 = scmp.eq.s32.totalorder %s28, 3
      %p154 = por %p152, %p153
      %p156 = scmp.ne.s32.totalorder %s139, %s155
      %p157 = scmp.eq.s32.totalorder %s28, 0
      %p158 = por %p156, %p157
      %s159 = ssub.s32 %s29, %s41
      %s160 = ssub.s32 %s30, %s37
      %s161 = sor.u32 %s159, %s160
      %p162 = scmp.eq.s32.totalorder %s161, 0
      %s164 = sadd.s32 %s163, 1
      %s165 = scalar_select %p162, %s163, %s164
      %p168 = pneg %p162
      %p169 = scmp.eq.s32.totalorder %s22, 3
      %p170 = por %p168, %p169
      %p171 = scmp.ne.s32.totalorder %s163, %s166
      %p172 = scmp.eq.s32.totalorder %s22, 0
      %p173 = por %p171, %p172
      %p174 = scmp.ne.s32.totalorder %s163, %s166
      %p175 = scmp.eq.s32.totalorder %s27, 3
      %p176 = por %p174, %p175
      %p177 = scmp.ne.s32.totalorder %s166, %s167
      %p178 = scmp.eq.s32.totalorder %s27, 0
      %p179 = por %p177, %p178
      %p180 = scmp.ne.s32.totalorder %s166, %s167
      %p181 = scmp.eq.s32.totalorder %s28, 3
      %p182 = por %p180, %p181
      %p184 = scmp.ne.s32.totalorder %s167, %s183
      %p185 = scmp.eq.s32.totalorder %s28, 0
      %p186 = por %p184, %p185
      %p187 = scmp.le.s32.totalorder 1, %s22
      %p188 = scmp.lt.s32.totalorder %s22, 5
      %p189 = pnand %p187, %p188
      %p190 = pneg %p189
      // Predicated region
      $region9: #{tpu_custom_call.1} parent=5 // pred_check
        _
      $region10: #{tpu_custom_call.1} parent=5 // pred_check_branch
        %192 = sbr.rel (%p189) target = $region12
      $region11: #{tpu_custom_call.1} parent=5 // pred_region
        %s193 = ssub.s32 %s22, 1
        // Predicated region
        $region13: #{tpu_custom_call.1} parent=11 // pred_check
          %p194 = pneg %p81
        $region14: #{tpu_custom_call.1} parent=11 // pred_check_branch
          %196 = sbr.rel (%p194) target = $region16
        $region15: #{tpu_custom_call.1} parent=11 // pred_region
          %198 = vsyncadd [#allocation10], 0
          %s199 = sshll.u32 %s1, 4
          %s200 = int_to_ptr.hbm [resolvable:$true] %s199
          %s201 = sshll.u32 [#allocation9], 4
          %s202 = int_to_ptr.vmem [resolvable:$true] %s201
          %207 = dma.hbm_to_vmem [thread:$0]  %s200, 512, %s202, [#allocation10], 128, 128, 8
        $region16: #{tpu_custom_call.1} parent=11 // pred_fallthru
          _
        // Predicated region
        $region17: #{tpu_custom_call.1} parent=11 // pred_check
          %p208 = pneg %p102
        $region18: #{tpu_custom_call.1} parent=11 // pred_check_branch
          %210 = sbr.rel (%p208) target = $region20
        $region19: #{tpu_custom_call.1} parent=11 // pred_region
          %212 = vsyncadd [#allocation10], 0
          %s213 = sshll.u32 %s2, 4
          %s214 = int_to_ptr.hbm [resolvable:$true] %s213
          %s215 = sshll.u32 [#allocation11], 4
          %s216 = int_to_ptr.vmem [resolvable:$true] %s215
          %221 = dma.hbm_to_vmem [thread:$0]  %s214, 512, %s216, [#allocation10], 128, 128, 8
        $region20: #{tpu_custom_call.1} parent=11 // pred_fallthru
          _
        // Predicated region
        $region21: #{tpu_custom_call.1} parent=11 // pred_check
          %p222 = pneg %p123
        $region22: #{tpu_custom_call.1} parent=11 // pred_check_branch
          %224 = sbr.rel (%p222) target = $region24
        $region23: #{tpu_custom_call.1} parent=11 // pred_region
          _
        $region24: #{tpu_custom_call.1} parent=11 // pred_fallthru
          _
      $region12: #{tpu_custom_call.1} parent=5 // pred_fallthru
        _
      %p225 = scmp.lt.s32.totalorder %s22, 4
      // Predicated region
      $region25: #{tpu_custom_call.1} parent=5 // pred_check
        %p226 = pneg %p225
      $region26: #{tpu_custom_call.1} parent=5 // pred_check_branch
        %228 = sbr.rel (%p226) target = $region28
      $region27: #{tpu_custom_call.1} parent=5 // pred_region
        // Predicated region
        $region29: #{tpu_custom_call.1} parent=27 // pred_check
          %p229 = pneg %p54
        $region30: #{tpu_custom_call.1} parent=27 // pred_check_branch
          %231 = sbr.rel (%p229) target = $region32
        $region31: #{tpu_custom_call.1} parent=27 // pred_region
          %s232 = sand.u32 %s44, 1
          %s233 = scalar_lea.sflag [#allocation7], %s232
          %s234 = sand.u32 %s44, 1
          %s235 = smul.addr %s234, 16
          %s236 = scalar_lea.vmem [#allocation6], %s235
          %238 = vsyncadd %s233, 0
          %s239 = smul.addr %s29, 2
          %s240 = smul.addr %s239, 8
          %s241 = scalar_lea.hbm %s0, %s240
          %s242 = sshll.u32 %s241, 4
          %s243 = int_to_ptr.hbm [resolvable:$true] %s242
          %s244 = sshll.u32 %s236, 4
          %s245 = int_to_ptr.vmem [resolvable:$true] %s244
          %250 = dma.hbm_to_vmem [thread:$0]  %s243, 256, %s245, %s233, 128, 128, 8
        $region32: #{tpu_custom_call.1} parent=27 // pred_fallthru
          _
      $region28: #{tpu_custom_call.1} parent=5 // pred_fallthru
        _
      %p251 = scmp.le.s32.totalorder 1, %s22
      %p252 = scmp.lt.s32.totalorder %s22, 5
      %p253 = pnand %p251, %p252
      %p254 = pneg %p253
      // Predicated region
      $region33: #{tpu_custom_call.1} parent=5 // pred_check
        _
      $region34: #{tpu_custom_call.1} parent=5 // pred_check_branch
        %256 = sbr.rel (%p253) target = $region36
      $region35: #{tpu_custom_call.1} parent=5 // pred_region
        %s257 = ssub.s32 %s22, 1
        %s258 = sand.u32 %s47, 1
        %s259 = scalar_lea.sflag [#allocation7], %s258
        %s260 = sand.u32 %s47, 1
        %s261 = smul.addr %s260, 16
        %s262 = scalar_lea.vmem [#allocation6], %s261
        // Predicated region
        $region37: #{tpu_custom_call.1} parent=35 // pred_check
          %p263 = pneg %p60
        $region38: #{tpu_custom_call.1} parent=35 // pred_check_branch
          %265 = sbr.rel (%p263) target = $region40
        $region39: #{tpu_custom_call.1} parent=35 // pred_region
          %267 = dma.done %s259, 256
        $region40: #{tpu_custom_call.1} parent=35 // pred_fallthru
          _
        // Predicated region
        $region41: #{tpu_custom_call.1} parent=35 // pred_check
          %p268 = pneg %p81
        $region42: #{tpu_custom_call.1} parent=35 // pred_check_branch
          %270 = sbr.rel (%p268) target = $region44
        $region43: #{tpu_custom_call.1} parent=35 // pred_region
          %272 = dma.done [#allocation10], 512
        $region44: #{tpu_custom_call.1} parent=35 // pred_fallthru
          _
        // Predicated region
        $region45: #{tpu_custom_call.1} parent=35 // pred_check
          %p273 = pneg %p102
        $region46: #{tpu_custom_call.1} parent=35 // pred_check_branch
          %275 = sbr.rel (%p273) target = $region48
        $region47: #{tpu_custom_call.1} parent=35 // pred_region
          %277 = dma.done [#allocation10], 512
        $region48: #{tpu_custom_call.1} parent=35 // pred_fallthru
          _
        %s278 = sand.u32 %s47, 1
        %s279 = scalar_lea.sflag [#allocation7], %s278
        %s280 = sand.u32 %s47, 1
        %s281 = smul.addr %s280, 16
        %s282 = scalar_lea.vmem [#allocation6], %s281
        %p283 = pneg %p60
        %p284 = pneg %p57
        %p285 = pneg %p81
        %p286 = pneg %p78
        %p287 = pneg %p102
        %p288 = pneg %p99
        %p289 = pneg %p123
        %p290 = pneg %p120
        %p291 = pneg %p151
        %p292 = pneg %p148
        %s293 = sand.u32 %s138, 1
        %s294 = scalar_lea.sflag [#allocation8], %s293
        %s295 = sand.u32 %s138, 1
        %s296 = smul.addr %s295, 8
        %s297 = scalar_lea.vmem [#allocation12], %s296
        %p298 = pneg %p179
        %p299 = pneg %p176
        %s300 = sand.u32 %s166, 1
        %s301 = scalar_lea.sflag [#allocation14], %s300
        %s302 = sand.u32 %s166, 1
        %s303 = smul.addr %s302, 32
        %s304 = scalar_lea.vmem [#allocation13], %s303
        %p305 = scmp.eq.s32.totalorder %s32, 0
        // Predicated region
        $region49: #{tpu_custom_call.1} parent=35 // pred_check
          %p306 = pneg %p305
        $region50: #{tpu_custom_call.1} parent=35 // pred_check_branch
          %308 = sbr.rel (%p306) target = $region52
        $region51: #{tpu_custom_call.1} parent=35 // pred_region
          %v309 = vld [vmem:[%s262] sm:$0xff]
          %v310 = vld [vmem:[%s262 + $0x8] sm:$0xff]
          %v311 = vld [vmem:[#allocation9] sm:$0xff]
          %v312 = vld [vmem:[#allocation9 + $0x8] sm:$0xff]
          %v313 = vld [vmem:[#allocation9 + $0x10] sm:$0xff]
          %v314 = vld [vmem:[#allocation9 + $0x18] sm:$0xff]
          %vm315 = vcmask 261120
          %v317 = vsel %vm315, %v309, 0
          %v320 = vsel %vm315, %v310, 0
          %322 = vmatpush.msra.mxu0 0.0
          %323 = vmatpush.msra.mxu0 0.0
          %324 = vmatpush.msra.mxu0 0.0
          %325 = vmatpush.msra.mxu0 0.0
          %326 = vmatpush.msra.mxu0 0.0
          %327 = vmatpush.msra.mxu0 0.0
          %328 = vmatpush.msra.mxu0 0.0
          %329 = vmatpush.msra.mxu0 0.0
          %330 = vmatpush.msra.mxu0 0.0
          %331 = vmatpush.msra.mxu0 0.0
          %332 = vmatpush.msra.mxu0 0.0
          %333 = vmatpush.msra.mxu0 0.0
          %334 = vmatpush.msra.mxu0 %v314
          %335 = vmatpush.msra.mxu0 %v313
          %336 = vmatpush.msra.mxu0 %v312
          %337 = vmatpush.msra.mxu0 %v311
          %338 = vmatmul.f32.gmra.mxu0 %v317
          %v339 = vpop.f32.mrf.mxu0
          %v340 = vadd.f32 0.0, %v339
          %341 = vmatmul.f32.gmra.mxu0 %v320
          %v342 = vpop.f32.mrf.mxu0
          %v343 = vadd.f32 0.0, %v342
          %344 = vdwg.mxu0
          %v345 = vmul.f32 %v340, 0.35355338
          %v346 = vmul.f32 %v343, 0.35355338
          %vm347 = vcmask 64512
          %348 = vst.msk [vmem:[#allocation2] sm:$0xff] %vm347, %v345
          %349 = vst.msk [vmem:[#allocation2 + $0x8] sm:$0xff] %vm347, %v346
          %352 = vrot.lane.b32.xlu0 %v340, 96
          %v353 = vpop.permute.xlu0 %352
          %354 = vrot.lane.b32.xlu0 %v343, 96
          %v355 = vpop.permute.xlu0 %354
          %358 = vst.msk [vmem:[#allocation3] sm:$0xff] %vm347, %v353
          %359 = vst.msk [vmem:[#allocation3 + $0x8] sm:$0xff] %vm347, %v355
          %360 = vrot.lane.b32.xlu0 %v340, 64
          %v361 = vpop.permute.xlu0 %360
          %362 = vrot.lane.b32.xlu0 %v343, 64
          %v363 = vpop.permute.xlu0 %362
          %366 = vst.msk [vmem:[#allocation4] sm:$0xff] %vm347, %v361
          %367 = vst.msk [vmem:[#allocation4 + $0x8] sm:$0xff] %vm347, %v363
          %370 = vrot.lane.b32.xlu0 %v345, 120
          %v371 = vpop.permute.xlu0 %370
          %372 = vrot.lane.b32.xlu0 %v346, 120
          %v373 = vpop.permute.xlu0 %372
          %s376 = scalar_lea.vmem [#allocation2], 16
          %377 = vst.msk [vmem:[%s376] sm:$0xff] %vm347, %v371
          %378 = vst.msk [vmem:[%s376 + $0x8] sm:$0xff] %vm347, %v373
          %379 = vrot.lane.b32.xlu0 %v340, 88
          %v380 = vpop.permute.xlu0 %379
          %381 = vrot.lane.b32.xlu0 %v343, 88
          %v382 = vpop.permute.xlu0 %381
          %s385 = scalar_lea.vmem [#allocation3], 16
          %386 = vst.msk [vmem:[%s385] sm:$0xff] %vm347, %v380
          %387 = vst.msk [vmem:[%s385 + $0x8] sm:$0xff] %vm347, %v382
          %388 = vrot.lane.b32.xlu0 %v340, 56
          %v389 = vpop.permute.xlu0 %388
          %390 = vrot.lane.b32.xlu0 %v343, 56
          %v391 = vpop.permute.xlu0 %390
          %s394 = scalar_lea.vmem [#allocation4], 16
          %395 = vst.msk [vmem:[%s394] sm:$0xff] %vm347, %v389
          %396 = vst.msk [vmem:[%s394 + $0x8] sm:$0xff] %vm347, %v391
          %397 = vrot.lane.b32.xlu0 %v345, 112
          %v398 = vpop.permute.xlu0 %397
          %399 = vrot.lane.b32.xlu0 %v346, 112
          %v400 = vpop.permute.xlu0 %399
          %s403 = scalar_lea.vmem [#allocation2], 32
          %404 = vst.msk [vmem:[%s403] sm:$0xff] %vm347, %v398
          %405 = vst.msk [vmem:[%s403 + $0x8] sm:$0xff] %vm347, %v400
          %406 = vrot.lane.b32.xlu0 %v340, 80
          %v407 = vpop.permute.xlu0 %406
          %408 = vrot.lane.b32.xlu0 %v343, 80
          %v409 = vpop.permute.xlu0 %408
          %s412 = scalar_lea.vmem [#allocation3], 32
          %413 = vst.msk [vmem:[%s412] sm:$0xff] %vm347, %v407
          %414 = vst.msk [vmem:[%s412 + $0x8] sm:$0xff] %vm347, %v409
          %415 = vrot.lane.b32.xlu0 %v340, 48
          %v416 = vpop.permute.xlu0 %415
          %417 = vrot.lane.b32.xlu0 %v343, 48
          %v418 = vpop.permute.xlu0 %417
          %s421 = scalar_lea.vmem [#allocation4], 32
          %422 = vst.msk [vmem:[%s421] sm:$0xff] %vm347, %v416
          %423 = vst.msk [vmem:[%s421 + $0x8] sm:$0xff] %vm347, %v418
          %424 = vrot.lane.b32.xlu0 %v345, 104
          %v425 = vpop.permute.xlu0 %424
          %426 = vrot.lane.b32.xlu0 %v346, 104
          %v427 = vpop.permute.xlu0 %426
          %s430 = scalar_lea.vmem [#allocation2], 48
          %431 = vst.msk [vmem:[%s430] sm:$0xff] %vm347, %v425
          %432 = vst.msk [vmem:[%s430 + $0x8] sm:$0xff] %vm347, %v427
          %433 = vrot.lane.b32.xlu0 %v340, 72
          %v434 = vpop.permute.xlu0 %433
          %435 = vrot.lane.b32.xlu0 %v343, 72
          %v436 = vpop.permute.xlu0 %435
          %s439 = scalar_lea.vmem [#allocation3], 48
          %440 = vst.msk [vmem:[%s439] sm:$0xff] %vm347, %v434
          %441 = vst.msk [vmem:[%s439 + $0x8] sm:$0xff] %vm347, %v436
          %442 = vrot.lane.b32.xlu0 %v340, 40
          %v443 = vpop.permute.xlu0 %442
          %444 = vrot.lane.b32.xlu0 %v343, 40
          %v445 = vpop.permute.xlu0 %444
          %s448 = scalar_lea.vmem [#allocation4], 48
          %449 = vst.msk [vmem:[%s448] sm:$0xff] %vm347, %v443
          %450 = vst.msk [vmem:[%s448 + $0x8] sm:$0xff] %vm347, %v445
        $region52: #{tpu_custom_call.1} parent=35 // pred_fallthru
          _
        %s451 = smul.u32 %s32, 8
        %s452 = scalar_lea.vmem [#allocation2], %s451
        %v453 = vld [vmem:[%s452] sm:$0xff]
        %v454 = vld [vmem:[%s452 + $0x10] sm:$0xff]
        %v455 = vld [vmem:[%s452 + $0x20] sm:$0xff]
        %v456 = vld [vmem:[%s452 + $0x30] sm:$0xff]
        %v457 = vld [vmem:[#allocation3] sm:$0xff]
        %v458 = vld [vmem:[#allocation3 + $0x8] sm:$0xff]
        %v459 = vld [vmem:[#allocation3 + $0x10] sm:$0xff]
        %v460 = vld [vmem:[#allocation3 + $0x18] sm:$0xff]
        %v461 = vld [vmem:[#allocation3 + $0x20] sm:$0xff]
        %v462 = vld [vmem:[#allocation3 + $0x28] sm:$0xff]
        %v463 = vld [vmem:[#allocation3 + $0x30] sm:$0xff]
        %v464 = vld [vmem:[#allocation3 + $0x38] sm:$0xff]
        %v465 = vld [vmem:[#allocation4] sm:$0xff]
        %v466 = vld [vmem:[#allocation4 + $0x8] sm:$0xff]
        %v467 = vld [vmem:[#allocation4 + $0x10] sm:$0xff]
        %v468 = vld [vmem:[#allocation4 + $0x18] sm:$0xff]
        %v469 = vld [vmem:[#allocation4 + $0x20] sm:$0xff]
        %v470 = vld [vmem:[#allocation4 + $0x28] sm:$0xff]
        %v471 = vld [vmem:[#allocation4 + $0x30] sm:$0xff]
        %v472 = vld [vmem:[#allocation4 + $0x38] sm:$0xff]
        %vm473 = vcmask 64512
        %v475 = vsel %vm473, %v453, 0
        %v478 = vsel %vm473, %v457, 0
        %v481 = vsel %vm473, %v458, 0
        %483 = vmatpush.xpose.msra.mxu0 0.0
        %484 = vmatpush.xpose.msra.mxu0 0.0
        %485 = vmatpush.xpose.msra.mxu0 0.0
        %486 = vmatpush.xpose.msra.mxu0 0.0
        %487 = vmatpush.xpose.msra.mxu0 0.0
        %488 = vmatpush.xpose.msra.mxu0 0.0
        %489 = vmatpush.xpose.msra.mxu0 0.0
        %490 = vmatpush.xpose.msra.mxu0 0.0
        %491 = vmatpush.xpose.msra.mxu0 0.0
        %492 = vmatpush.xpose.msra.mxu0 0.0
        %493 = vmatpush.xpose.msra.mxu0 0.0
        %494 = vmatpush.xpose.msra.mxu0 0.0
        %495 = vmatpush.xpose.msra.mxu0 0.0
        %496 = vmatpush.xpose.msra.mxu0 0.0
        %497 = vmatpush.xpose.msra.mxu0 %v481
        %498 = vmatpush.xpose.msra.mxu0 %v478
        %499 = vmatmul.f32.gmra.mxu0 %v475
        %v500 = vpop.f32.mrf.mxu0
        %v501 = vadd.f32 0.0, %v500
        %502 = vdwg.mxu0
        %v504 = vsel %vm473, %v454, 0
        %v507 = vsel %vm473, %v459, 0
        %v510 = vsel %vm473, %v460, 0
        %512 = vmatpush.xpose.msra.mxu0 0.0
        %513 = vmatpush.xpose.msra.mxu0 0.0
        %514 = vmatpush.xpose.msra.mxu0 0.0
        %515 = vmatpush.xpose.msra.mxu0 0.0
        %516 = vmatpush.xpose.msra.mxu0 0.0
        %517 = vmatpush.xpose.msra.mxu0 0.0
        %518 = vmatpush.xpose.msra.mxu0 0.0
        %519 = vmatpush.xpose.msra.mxu0 0.0
        %520 = vmatpush.xpose.msra.mxu0 0.0
        %521 = vmatpush.xpose.msra.mxu0 0.0
        %522 = vmatpush.xpose.msra.mxu0 0.0
        %523 = vmatpush.xpose.msra.mxu0 0.0
        %524 = vmatpush.xpose.msra.mxu0 0.0
        %525 = vmatpush.xpose.msra.mxu0 0.0
        %526 = vmatpush.xpose.msra.mxu0 %v510
        %527 = vmatpush.xpose.msra.mxu0 %v507
        %528 = vmatmul.f32.gmra.mxu0 %v504
        %v529 = vpop.f32.mrf.mxu0
        %v530 = vadd.f32 0.0, %v529
        %531 = vdwg.mxu0
        %v533 = vsel %vm473, %v455, 0
        %v536 = vsel %vm473, %v461, 0
        %v539 = vsel %vm473, %v462, 0
        %541 = vmatpush.xpose.msra.mxu0 0.0
        %542 = vmatpush.xpose.msra.mxu0 0.0
        %543 = vmatpush.xpose.msra.mxu0 0.0
        %544 = vmatpush.xpose.msra.mxu0 0.0
        %545 = vmatpush.xpose.msra.mxu0 0.0
        %546 = vmatpush.xpose.msra.mxu0 0.0
        %547 = vmatpush.xpose.msra.mxu0 0.0
        %548 = vmatpush.xpose.msra.mxu0 0.0
        %549 = vmatpush.xpose.msra.mxu0 0.0
        %550 = vmatpush.xpose.msra.mxu0 0.0
        %551 = vmatpush.xpose.msra.mxu0 0.0
        %552 = vmatpush.xpose.msra.mxu0 0.0
        %553 = vmatpush.xpose.msra.mxu0 0.0
        %554 = vmatpush.xpose.msra.mxu0 0.0
        %555 = vmatpush.xpose.msra.mxu0 %v539
        %556 = vmatpush.xpose.msra.mxu0 %v536
        %557 = vmatmul.f32.gmra.mxu0 %v533
        %v558 = vpop.f32.mrf.mxu0
        %v559 = vadd.f32 0.0, %v558
        %560 = vdwg.mxu0
        %v562 = vsel %vm473, %v456, 0
        %v565 = vsel %vm473, %v463, 0
        %v568 = vsel %vm473, %v464, 0
        %570 = vmatpush.xpose.msra.mxu0 0.0
        %571 = vmatpush.xpose.msra.mxu0 0.0
        %572 = vmatpush.xpose.msra.mxu0 0.0
        %573 = vmatpush.xpose.msra.mxu0 0.0
        %574 = vmatpush.xpose.msra.mxu0 0.0
        %575 = vmatpush.xpose.msra.mxu0 0.0
        %576 = vmatpush.xpose.msra.mxu0 0.0
        %577 = vmatpush.xpose.msra.mxu0 0.0
        %578 = vmatpush.xpose.msra.mxu0 0.0
        %579 = vmatpush.xpose.msra.mxu0 0.0
        %580 = vmatpush.xpose.msra.mxu0 0.0
        %581 = vmatpush.xpose.msra.mxu0 0.0
        %582 = vmatpush.xpose.msra.mxu0 0.0
        %583 = vmatpush.xpose.msra.mxu0 0.0
        %584 = vmatpush.xpose.msra.mxu0 %v568
        %585 = vmatpush.xpose.msra.mxu0 %v565
        %586 = vmatmul.f32.gmra.mxu0 %v562
        %v587 = vpop.f32.mrf.mxu0
        %v588 = vadd.f32 0.0, %v587
        %589 = vdwg.mxu0
        %vm590 = vcmask 130048
        %v591 = vsel %vm590, %v501, -inf
        %592 = vmax.xlane.f32.xlu0 %v591
        %v593 = vpop.xlane.xlu0 %592
        %v594 = vsel %vm590, %v530, -inf
        %595 = vmax.xlane.f32.xlu0 %v594
        %v596 = vpop.xlane.xlu0 %595
        %v597 = vsel %vm590, %v559, -inf
        %598 = vmax.xlane.f32.xlu0 %v597
        %v599 = vpop.xlane.xlu0 %598
        %v600 = vsel %vm590, %v588, -inf
        %601 = vmax.xlane.f32.xlu0 %v600
        %v602 = vpop.xlane.xlu0 %601
        %v603 = vsub.f32 %v501, %v593
        %v604 = vsub.f32 %v530, %v596
        %v605 = vsub.f32 %v559, %v599
        %v606 = vsub.f32 %v588, %v602
        %v607 = vmul.f32 %v603, 1.442695
        %v608 = vpow.pop %v607
        %v609 = vmul.f32 %v604, 1.442695
        %v610 = vpow.pop %v609
        %v611 = vmul.f32 %v605, 1.442695
        %v612 = vpow.pop %v611
        %v613 = vmul.f32 %v606, 1.442695
        %v614 = vpow.pop %v613
        %v615 = vsel %vm590, %v608, 0.0
        %616 = vadd.xlane.f32.xlu0 %v615
        %v617 = vpop.xlane.xlu0 %616
        %v618 = vsel %vm590, %v610, 0.0
        %619 = vadd.xlane.f32.xlu0 %v618
        %v620 = vpop.xlane.xlu0 %619
        %v621 = vsel %vm590, %v612, 0.0
        %622 = vadd.xlane.f32.xlu0 %v621
        %v623 = vpop.xlane.xlu0 %622
        %v624 = vsel %vm590, %v614, 0.0
        %625 = vadd.xlane.f32.xlu0 %v624
        %v626 = vpop.xlane.xlu0 %625
        %v627 = vrcp.pop %v617
        %v628 = vmul.f32 %v617, %v627
        %v629 = vsub.f32 1.0, %v628
        %v630 = vmul.f32 %v627, %v629
        %v631 = vadd.f32 %v627, %v630
        %vm632 = vweird.f32 %v617
        %vm633 = vweird.f32 %v627
        %vm634 = vmor %vm632, %vm633
        %v635 = vsel %vm634, %v627, %v631
        %v636 = vand.u32 2147483647, %v617
        %vm637 = vcmp.eq.f32.partialorder %v636, 8.507059e+37
        %v638 = vand.u32 %v617, 2147483648
        %v639 = vor.u32 1.1754944e-38, %v638
        %v640 = vsel %vm637, %v639, %v635
        %v641 = vrcp.pop %v620
        %v642 = vmul.f32 %v620, %v641
        %v643 = vsub.f32 1.0, %v642
        %v644 = vmul.f32 %v641, %v643
        %v645 = vadd.f32 %v641, %v644
        %vm646 = vweird.f32 %v620
        %vm647 = vweird.f32 %v641
        %vm648 = vmor %vm646, %vm647
        %v649 = vsel %vm648, %v641, %v645
        %v650 = vand.u32 2147483647, %v620
        %vm651 = vcmp.eq.f32.partialorder %v650, 8.507059e+37
        %v652 = vand.u32 %v620, 2147483648
        %v653 = vor.u32 1.1754944e-38, %v652
        %v654 = vsel %vm651, %v653, %v649
        %v655 = vrcp.pop %v623
        %v656 = vmul.f32 %v623, %v655
        %v657 = vsub.f32 1.0, %v656
        %v658 = vmul.f32 %v655, %v657
        %v659 = vadd.f32 %v655, %v658
        %vm660 = vweird.f32 %v623
        %vm661 = vweird.f32 %v655
        %vm662 = vmor %vm660, %vm661
        %v663 = vsel %vm662, %v655, %v659
        %v664 = vand.u32 2147483647, %v623
        %vm665 = vcmp.eq.f32.partialorder %v664, 8.507059e+37
        %v666 = vand.u32 %v623, 2147483648
        %v667 = vor.u32 1.1754944e-38, %v666
        %v668 = vsel %vm665, %v667, %v663
        %v669 = vrcp.pop %v626
        %v670 = vmul.f32 %v626, %v669
        %v671 = vsub.f32 1.0, %v670
        %v672 = vmul.f32 %v669, %v671
        %v673 = vadd.f32 %v669, %v672
        %vm674 = vweird.f32 %v626
        %vm675 = vweird.f32 %v669
        %vm676 = vmor %vm674, %vm675
        %v677 = vsel %vm676, %v669, %v673
        %v678 = vand.u32 2147483647, %v626
        %vm679 = vcmp.eq.f32.partialorder %v678, 8.507059e+37
        %v680 = vand.u32 %v626, 2147483648
        %v681 = vor.u32 1.1754944e-38, %v680
        %v682 = vsel %vm679, %v681, %v677
        %v683 = vmul.f32 %v608, %v640
        %v684 = vmul.f32 %v610, %v654
        %v685 = vmul.f32 %v612, %v668
        %v686 = vmul.f32 %v614, %v682
        %687 = vst.msk [vmem:[%s304] sm:$0xff] %vm590, %v683
        %688 = vst.msk [vmem:[%s304 + $0x8] sm:$0xff] %vm590, %v684
        %689 = vst.msk [vmem:[%s304 + $0x10] sm:$0xff] %vm590, %v685
        %690 = vst.msk [vmem:[%s304 + $0x18] sm:$0xff] %vm590, %v686
        %v692 = vsel %vm590, %v683, 0
        %694 = vmatpush.msra.mxu0 0.0
        %695 = vmatpush.msra.mxu0 0.0
        %696 = vmatpush.msra.mxu0 0.0
        %697 = vmatpush.msra.mxu0 0.0
        %698 = vmatpush.msra.mxu0 0.0
        %699 = vmatpush.msra.mxu0 0.0
        %700 = vmatpush.msra.mxu0 0.0
        %701 = vmatpush.msra.mxu0 0.0
        %702 = vmatpush.msra.mxu0 0.0
        %703 = vmatpush.msra.mxu0 0.0
        %704 = vmatpush.msra.mxu0 0.0
        %705 = vmatpush.msra.mxu0 0.0
        %706 = vmatpush.msra.mxu0 0.0
        %707 = vmatpush.msra.mxu0 0.0
        %708 = vmatpush.msra.mxu0 %v466
        %709 = vmatpush.msra.mxu0 %v465
        %710 = vmatmul.f32.gmra.mxu0 %v692
        %v711 = vpop.f32.mrf.mxu0
        %v712 = vadd.f32 0.0, %v711
        %713 = vdwg.mxu0
        %v715 = vsel %vm590, %v684, 0
        %717 = vmatpush.msra.mxu0 0.0
        %718 = vmatpush.msra.mxu0 0.0
        %719 = vmatpush.msra.mxu0 0.0
        %720 = vmatpush.msra.mxu0 0.0
        %721 = vmatpush.msra.mxu0 0.0
        %722 = vmatpush.msra.mxu0 0.0
        %723 = vmatpush.msra.mxu0 0.0
        %724 = vmatpush.msra.mxu0 0.0
        %725 = vmatpush.msra.mxu0 0.0
        %726 = vmatpush.msra.mxu0 0.0
        %727 = vmatpush.msra.mxu0 0.0
        %728 = vmatpush.msra.mxu0 0.0
        %729 = vmatpush.msra.mxu0 0.0
        %730 = vmatpush.msra.mxu0 0.0
        %731 = vmatpush.msra.mxu0 %v468
        %732 = vmatpush.msra.mxu0 %v467
        %733 = vmatmul.f32.gmra.mxu0 %v715
        %v734 = vpop.f32.mrf.mxu0
        %v735 = vadd.f32 0.0, %v734
        %736 = vdwg.mxu0
        %v738 = vsel %vm590, %v685, 0
        %740 = vmatpush.msra.mxu0 0.0
        %741 = vmatpush.msra.mxu0 0.0
        %742 = vmatpush.msra.mxu0 0.0
        %743 = vmatpush.msra.mxu0 0.0
        %744 = vmatpush.msra.mxu0 0.0
        %745 = vmatpush.msra.mxu0 0.0
        %746 = vmatpush.msra.mxu0 0.0
        %747 = vmatpush.msra.mxu0 0.0
        %748 = vmatpush.msra.mxu0 0.0
        %749 = vmatpush.msra.mxu0 0.0
        %750 = vmatpush.msra.mxu0 0.0
        %751 = vmatpush.msra.mxu0 0.0
        %752 = vmatpush.msra.mxu0 0.0
        %753 = vmatpush.msra.mxu0 0.0
        %754 = vmatpush.msra.mxu0 %v470
        %755 = vmatpush.msra.mxu0 %v469
        %756 = vmatmul.f32.gmra.mxu0 %v738
        %v757 = vpop.f32.mrf.mxu0
        %v758 = vadd.f32 0.0, %v757
        %759 = vdwg.mxu0
        %v761 = vsel %vm590, %v686, 0
        %763 = vmatpush.msra.mxu0 0.0
        %764 = vmatpush.msra.mxu0 0.0
        %765 = vmatpush.msra.mxu0 0.0
        %766 = vmatpush.msra.mxu0 0.0
        %767 = vmatpush.msra.mxu0 0.0
        %768 = vmatpush.msra.mxu0 0.0
        %769 = vmatpush.msra.mxu0 0.0
        %770 = vmatpush.msra.mxu0 0.0
        %771 = vmatpush.msra.mxu0 0.0
        %772 = vmatpush.msra.mxu0 0.0
        %773 = vmatpush.msra.mxu0 0.0
        %774 = vmatpush.msra.mxu0 0.0
        %775 = vmatpush.msra.mxu0 0.0
        %776 = vmatpush.msra.mxu0 0.0
        %777 = vmatpush.msra.mxu0 %v472
        %778 = vmatpush.msra.mxu0 %v471
        %779 = vmatmul.f32.gmra.mxu0 %v761
        %v780 = vpop.f32.mrf.mxu0
        %v781 = vadd.f32 0.0, %v780
        %782 = vdwg.mxu0
        %783 = vst.msk [vmem:[#allocation5] sm:$0xff] %vm473, %v712
        %785 = vrot.lane.b32.xlu0 %v735, 8
        %v786 = vpop.permute.xlu0 %785
        %vm788 = vcmask 130112
        %789 = vst.msk [vmem:[#allocation5] sm:$0xff] %vm788, %v786
        %791 = vrot.lane.b32.xlu0 %v758, 16
        %v792 = vpop.permute.xlu0 %791
        %vm794 = vcmask 195712
        %795 = vst.msk [vmem:[#allocation5] sm:$0xff] %vm794, %v792
        %797 = vrot.lane.b32.xlu0 %v781, 24
        %v798 = vpop.permute.xlu0 %797
        %vm800 = vcmask 261312
        %801 = vst.msk [vmem:[#allocation5] sm:$0xff] %vm800, %v798
        %v802 = vld [vmem:[#allocation5] sm:$0xff]
        %v803 = vld [vmem:[#allocation11] sm:$0xff]
        %v804 = vld [vmem:[#allocation11 + $0x8] sm:$0xff]
        %v805 = vld [vmem:[#allocation11 + $0x10] sm:$0xff]
        %v806 = vld [vmem:[#allocation11 + $0x18] sm:$0xff]
        %v807 = vld [vmem:[%s3] sm:$0x1]
        %v809 = vperm.slane %v807, 0
        %vm811 = vcmask 261120
        %v813 = vsel %vm811, %v802, 0
        %815 = vmatpush.msra.mxu0 0.0
        %816 = vmatpush.msra.mxu0 0.0
        %817 = vmatpush.msra.mxu0 0.0
        %818 = vmatpush.msra.mxu0 0.0
        %819 = vmatpush.msra.mxu0 0.0
        %820 = vmatpush.msra.mxu0 0.0
        %821 = vmatpush.msra.mxu0 0.0
        %822 = vmatpush.msra.mxu0 0.0
        %823 = vmatpush.msra.mxu0 0.0
        %824 = vmatpush.msra.mxu0 0.0
        %825 = vmatpush.msra.mxu0 0.0
        %826 = vmatpush.msra.mxu0 0.0
        %827 = vmatpush.msra.mxu0 %v806
        %828 = vmatpush.msra.mxu0 %v805
        %829 = vmatpush.msra.mxu0 %v804
        %830 = vmatpush.msra.mxu0 %v803
        %831 = vmatmul.f32.gmra.mxu0 %v813
        %v832 = vpop.f32.mrf.mxu0
        %v833 = vadd.f32 %v809, %v832
        %834 = vdwg.mxu0
        %835 = vst.msk [vmem:[%s297] sm:$0xff] %vm811, %v833
        %s836 = sand.u32 %s138, 1
        %s837 = scalar_lea.sflag [#allocation8], %s836
        %s838 = sand.u32 %s138, 1
        %s839 = smul.addr %s838, 8
        %s840 = scalar_lea.vmem [#allocation12], %s839
        %s841 = sand.u32 %s166, 1
        %s842 = scalar_lea.sflag [#allocation14], %s841
        %s843 = sand.u32 %s166, 1
        %s844 = smul.addr %s843, 32
        %s845 = scalar_lea.vmem [#allocation13], %s844
        // Predicated region
        $region53: #{tpu_custom_call.1} parent=35 // pred_check
          %p846 = pneg %p148
        $region54: #{tpu_custom_call.1} parent=35 // pred_check_branch
          %848 = sbr.rel (%p846) target = $region56
        $region55: #{tpu_custom_call.1} parent=35 // pred_region
          %850 = vsyncadd %s837, 0
          %s851 = smul.addr %s31, 2
          %s852 = sadd.s32 %s32, %s851
          %s853 = smul.addr %s852, 8
          %s854 = scalar_lea.hbm %s4, %s853
          %s856 = sshll.u32 %s840, 4
          %s857 = int_to_ptr.vmem [resolvable:$true] %s856
          %s858 = sshll.u32 %s854, 4
          %s859 = int_to_ptr.hbm [resolvable:$true] %s858
          %861 = dma.vmem_to_hbm [thread:$0]  %s857, 128, %s859, %s837
        $region56: #{tpu_custom_call.1} parent=35 // pred_fallthru
          _
        // Predicated region
        $region57: #{tpu_custom_call.1} parent=35 // pred_check
          %p862 = pneg %p176
        $region58: #{tpu_custom_call.1} parent=35 // pred_check_branch
          %864 = sbr.rel (%p862) target = $region60
        $region59: #{tpu_custom_call.1} parent=35 // pred_region
          %866 = vsyncadd %s842, 0
          %s867 = smul.addr %s31, 8
          %s868 = sadd.s32 %s32, %s867
          %s869 = smul.addr %s868, 8
          %s870 = scalar_lea.hbm %s5, %s869
          %s871 = sshll.u32 %s845, 4
          %s872 = int_to_ptr.vmem [resolvable:$true] %s871
          %s873 = sshll.u32 %s870, 4
          %s874 = int_to_ptr.hbm [resolvable:$true] %s873
          %879 = dma.vmem_to_hbm [thread:$0]  %s872, 512, %s874, %s842, 128, 256, 8
        $region60: #{tpu_custom_call.1} parent=35 // pred_fallthru
          _
      $region36: #{tpu_custom_call.1} parent=5 // pred_fallthru
        _
      %p880 = scmp.le.s32.totalorder 2, %s22
      // Predicated region
      $region61: #{tpu_custom_call.1} parent=5 // pred_check
        %p881 = pneg %p880
      $region62: #{tpu_custom_call.1} parent=5 // pred_check_branch
        %883 = sbr.rel (%p881) target = $region64
      $region63: #{tpu_custom_call.1} parent=5 // pred_region
        %s884 = ssub.s32 %s22, 2
        // Predicated region
        $region65: #{tpu_custom_call.1} parent=63 // pred_check
          %p885 = pneg %p154
        $region66: #{tpu_custom_call.1} parent=63 // pred_check_branch
          %887 = sbr.rel (%p885) target = $region68
        $region67: #{tpu_custom_call.1} parent=63 // pred_region
          %s888 = sand.u32 %s139, 1
          %s889 = scalar_lea.sflag [#allocation8], %s888
          %s890 = sand.u32 %s139, 1
          %s891 = smul.addr %s890, 8
          %s892 = scalar_lea.vmem [#allocation12], %s891
          %894 = dma.done %s889, 128
        $region68: #{tpu_custom_call.1} parent=63 // pred_fallthru
          _
        // Predicated region
        $region69: #{tpu_custom_call.1} parent=63 // pred_check
          %p895 = pneg %p182
        $region70: #{tpu_custom_call.1} parent=63 // pred_check_branch
          %897 = sbr.rel (%p895) target = $region72
        $region71: #{tpu_custom_call.1} parent=63 // pred_region
          %s898 = sand.u32 %s167, 1
          %s899 = scalar_lea.sflag [#allocation14], %s898
          %s900 = sand.u32 %s167, 1
          %s901 = smul.addr %s900, 32
          %s902 = scalar_lea.vmem [#allocation13], %s901
          %904 = dma.done %s899, 512
        $region72: #{tpu_custom_call.1} parent=63 // pred_fallthru
          _
      $region64: #{tpu_custom_call.1} parent=5 // pred_fallthru
        _
    $region6: #{tpu_custom_call.1} parent=1 // loop_footer
      %s26 = sadd.s32 1, %s22
    $region7: #{tpu_custom_call.1} parent=1 // loop_footer_branch
      %21 = sbr.rel target = $region3
    $region8: #{tpu_custom_call.1} parent=1 // loop_exit
      _
    %905 = vsyncpa [#allocation7], 1
    %s906 = scalar_lea.sflag [#allocation7], 1
    %907 = vsyncpa %s906, 1
    %908 = vsyncpa [#allocation10], 1
    %909 = vsyncpa [#allocation8], 1
    %s910 = scalar_lea.sflag [#allocation8], 1
    %911 = vsyncpa %s910, 1
    %912 = vsyncpa [#allocation14], 1
    %s913 = scalar_lea.sflag [#allocation14], 1
    %914 = vsyncpa %s913, 1

</llo_original>
